<compile_context>
chip_gen: v5e
topology: v5e:2x2
jax: 0.10.0
libtpu: 0.0.40
codegen_flags: <defaults>
</compile_context>

<pallas_src>
import functools

import jax
import jax.numpy as jnp
import numpy as np
from jax.experimental import pallas as pl
from jax.experimental.pallas import tpu as pltpu


def _round_up(x, m):
    return (x + m - 1) // m * m


def _pick_tile_m(M, K, target_bytes=2 << 20, cap=4096):
    """Pick an M-tile: ~2 MiB of bf16 patches, multiple of 8, <= cap."""
    tm = max(512, target_bytes // max(K * 2, 1))
    tm = min(int(tm), cap, _round_up(M, 8))
    return max(8, _round_up(tm, 8))


# ------------------------------------------------------------------ kernels --
def _matmul_bias_act_kernel(*refs, apply_silu, apply_scale):
    """out_tile = silu?(patches_tile @ W + bias) * scale?   (f32 accumulate)."""
    if apply_scale:
        p_ref, w_ref, b_ref, s_ref, o_ref = refs
    else:
        p_ref, w_ref, b_ref, o_ref = refs
        s_ref = None

    acc = jnp.dot(p_ref[...], w_ref[...], preferred_element_type=jnp.float32)
    acc = acc + b_ref[...]                      # bias in f32
    if apply_silu:
        acc = acc * jax.nn.sigmoid(acc)         # fused SiLU in f32
    if apply_scale:
        acc = acc * s_ref[0]                    # SMEM scalar (traced parameter)
    o_ref[...] = acc.astype(o_ref.dtype)


def _conv4_final_fused_kernel(p_ref, w4_ref, b4_ref, wf_ref, bf_ref, s_ref, o_ref):
    """Fused: h = silu(patches @ W4 + b4); out = (h @ Wf + bf) * scale."""
    acc = jnp.dot(p_ref[...], w4_ref[...], preferred_element_type=jnp.float32)
    acc = acc + b4_ref[...]
    acc = acc * jax.nn.sigmoid(acc)             # SiLU, f32
    h = acc.astype(jnp.bfloat16)                # matches layer-boundary cast
    out = jnp.dot(h, wf_ref[...], preferred_element_type=jnp.float32)
    out = out + bf_ref[...]
    out = out * s_ref[0]                        # learnable scale from SMEM
    o_ref[...] = out.astype(o_ref.dtype)


# --------------------------------------------------------------- im2col ------
def _im2col_nhwc(x, kh, kw, stride, padding):
    """NHWC -> (N*Ho*Wo, kh*kw*C) bf16 patch matrix, plus (N, Ho, Wo)."""
    N, H, W, C = x.shape
    Ho = (H + 2 * padding - kh) // stride + 1
    Wo = (W + 2 * padding - kw) // stride + 1
    xp = jnp.pad(x, ((0, 0), (padding, padding), (padding, padding), (0, 0)))
    cols = [
        xp[:, ki:ki + stride * Ho:stride, kj:kj + stride * Wo:stride, :]
        for ki in range(kh) for kj in range(kw)
    ]
    patches = (jnp.stack(cols, axis=3)
               .reshape(N * Ho * Wo, kh * kw * C)
               .astype(jnp.bfloat16))
    return patches, N, Ho, Wo


def _wmat(w):
    """OIHW -> (kh*kw*Cin, Cout) bf16, K-order matching _im2col_nhwc."""
    Cout, Cin, kh, kw = w.shape
    return w.transpose(2, 3, 1, 0).reshape(kh * kw * Cin, Cout).astype(jnp.bfloat16)


_COMPILER_PARAMS = pltpu.CompilerParams(
    dimension_semantics=("parallel",),          # shard M across TCs (v7x)
    vmem_limit_bytes=32 * 1024 * 1024,          # safe on v5e/v6e/v7x
)


# -------------------------------------------------------------- conv wrapper -
def conv2d_nhwc_pallas(x, w, b, stride, padding, *, apply_silu=False,
                       scale=None, out_dtype=jnp.bfloat16):
    """Conv2d on NHWC input (weights OIHW) via im2col + M-tiled Pallas matmul."""
    Cout, Cin, kh, kw = w.shape
    assert Cin == x.shape[-1]

    patches, N, Ho, Wo = _im2col_nhwc(x, kh, kw, stride, padding)
    wmat = _wmat(w)
    bias = b.reshape(1, Cout).astype(jnp.float32)

    M, K = patches.shape
    tm = _pick_tile_m(M, K)
    grid = (pl.cdiv(M, tm),)

    in_specs = [
        pl.BlockSpec((tm, K), lambda i: (i, 0)),    # M-tiled, pipelined patches
        pl.BlockSpec((K, Cout), lambda i: (0, 0)),  # resident weight
        pl.BlockSpec((1, Cout), lambda i: (0, 0)),  # resident bias
    ]
    operands = [patches, wmat, bias]

    apply_scale = scale is not None
    if apply_scale:
        in_specs.append(pl.BlockSpec(memory_space=pltpu.MemorySpace.SMEM))
        operands.append(jnp.asarray(scale, jnp.float32).reshape(1))

    out = pl.pallas_call(
        functools.partial(_matmul_bias_act_kernel,
                          apply_silu=apply_silu, apply_scale=apply_scale),
        out_shape=jax.ShapeDtypeStruct((M, Cout), out_dtype),
        grid=grid,
        in_specs=in_specs,
        out_specs=pl.BlockSpec((tm, Cout), lambda i: (i, 0)),
        compiler_params=_COMPILER_PARAMS,
    )(*operands)

    return out.reshape(N, Ho, Wo, Cout)


def conv4_final_fused_pallas(x, w4, b4, wf, bf, scale, *, out_dtype=jnp.float32):
    """Fused conv4 (3x3, s1, p1) + SiLU + final 1x1 projection + bias + scale."""
    Cout4, Cin4, kh, kw = w4.shape
    emb, Cin_f, _, _ = wf.shape
    assert Cin4 == x.shape[-1] and Cin_f == Cout4

    patches, N, Ho, Wo = _im2col_nhwc(x, kh, kw, 1, 1)
    w4mat = _wmat(w4)                                       # (K, 128)
    b4v = b4.reshape(1, Cout4).astype(jnp.float32)
    wfmat = wf.reshape(emb, Cin_f).T.astype(jnp.bfloat16)   # (128, emb)
    bfv = bf.reshape(1, emb).astype(jnp.float32)

    M, K = patches.shape
    tm = _pick_tile_m(M, K)
    grid = (pl.cdiv(M, tm),)

    out = pl.pallas_call(
        _conv4_final_fused_kernel,
        out_shape=jax.ShapeDtypeStruct((M, emb), out_dtype),
        grid=grid,
        in_specs=[
            pl.BlockSpec((tm, K), lambda i: (i, 0)),        # pipelined patches
            pl.BlockSpec((K, Cout4), lambda i: (0, 0)),     # resident W4
            pl.BlockSpec((1, Cout4), lambda i: (0, 0)),     # resident b4
            pl.BlockSpec((Cout4, emb), lambda i: (0, 0)),   # resident Wf
            pl.BlockSpec((1, emb), lambda i: (0, 0)),       # resident bf
            pl.BlockSpec(memory_space=pltpu.MemorySpace.SMEM),  # scale
        ],
        out_specs=pl.BlockSpec((tm, emb), lambda i: (i, 0)),
        compiler_params=_COMPILER_PARAMS,
    )(patches, w4mat, b4v, wfmat, bfv,
      jnp.asarray(scale, jnp.float32).reshape(1))

    return out.reshape(N, Ho, Wo, emb)


# ------------------------------------------------------- layout helpers ------
def _to_nhwc_frames(x5):
    """(b c f h w) -> ((b f) h w c)  — transpose only at module boundary."""
    B, C, F, H, W = x5.shape
    return jnp.transpose(x5, (0, 2, 3, 4, 1)).reshape(B * F, H, W, C), B, F


def _from_nhwc_frames(y4, B, F):
    """((b f) h w c) -> (b c f h w)."""
    N, H, W, C = y4.shape
    return jnp.transpose(y4.reshape(B, F, H, W, C), (0, 4, 1, 2, 3))


# ----------------------------------------------------------- parameter init --
def init_params(key, conditioning_embedding_channels, conditioning_channels=3,
                block_out_channels=(16, 32, 64, 128)):
    """Deterministic re-implementation of _initialize_weights()."""
    params = {}
    specs = [
        ("1", block_out_channels[0], conditioning_channels, 4),
        ("2", block_out_channels[1], block_out_channels[0], 4),
        ("3", block_out_channels[2], block_out_channels[1], 4),
        ("4", block_out_channels[3], block_out_channels[2], 3),
    ]
    for name, cout, cin, k in specs:
        key, sub = jax.random.split(key)
        n = k * k * cin
        std = np.sqrt(2.0 / n)
        params["w" + name] = std * jax.random.normal(sub, (cout, cin, k, k), jnp.float32)
        params["b" + name] = jnp.zeros((cout,), jnp.float32)
    # final_proj: zero-initialized 1x1 conv
    params["wf"] = jnp.zeros(
        (conditioning_embedding_channels, block_out_channels[3], 1, 1), jnp.float32
    )
    params["bf"] = jnp.zeros((conditioning_embedding_channels,), jnp.float32)
    params["scale"] = jnp.full((1,), 2.0, jnp.float32)  # nn.Parameter(ones(1)*2)
    return params


# ----------------------------------------------------------------- forward ---
def conv_layers_pallas(x, p):
    """Unfused conv stack (used to validate intermediate features)."""
    h, B, F = _to_nhwc_frames(x)
    h = conv2d_nhwc_pallas(h, p["w1"], p["b1"], 2, 1, apply_silu=True)
    h = conv2d_nhwc_pallas(h, p["w2"], p["b2"], 2, 1, apply_silu=True)
    h = conv2d_nhwc_pallas(h, p["w3"], p["b3"], 2, 1, apply_silu=True)
    h = conv2d_nhwc_pallas(h, p["w4"], p["b4"], 1, 1, apply_silu=True)
    return _from_nhwc_frames(h, B, F)


def pose_conditioning_embedding_pallas(x, p):
    h, B, F = _to_nhwc_frames(x)
    h = conv2d_nhwc_pallas(h, p["w1"], p["b1"], 2, 1, apply_silu=True)
    h = conv2d_nhwc_pallas(h, p["w2"], p["b2"], 2, 1, apply_silu=True)
    h = conv2d_nhwc_pallas(h, p["w3"], p["b3"], 2, 1, apply_silu=True)
    # conv4 + SiLU + final 1x1 proj + bias + learnable scale fused in one kernel
    h = conv4_final_fused_pallas(h, p["w4"], p["b4"], p["wf"], p["bf"],
                                 p["scale"], out_dtype=jnp.float32)
    return _from_nhwc_frames(h, B, F)


# --------------------------------------------------------- pure-JAX reference
# bf16-consistent reference (same casts as the Pallas path, f32 accumulation)
def _ref_inflated(x5, w, b, stride, pad, silu, scale=None, out_dtype=jnp.bfloat16):
    B, C, F, H, W = x5.shape
    x4 = x5.transpose(0, 2, 1, 3, 4).reshape(B * F, C, H, W).astype(jnp.bfloat16)
    y = jax.lax.conv_general_dilated(
        x4, w.astype(jnp.bfloat16), (stride, stride), [(pad, pad), (pad, pad)],
        dimension_numbers=("NCHW", "OIHW", "NCHW"),
        preferred_element_type=jnp.float32)
    y = y + b.astype(jnp.float32)[None, :, None, None]
    if silu:
        y = y * jax.nn.sigmoid(y)
    if scale is not None:
        y = y * scale.astype(jnp.float32)[0]
    y = y.astype(out_dtype)
    _, Cout, Ho, Wo = y.shape
    return y.reshape(B, F, Cout, Ho, Wo).transpose(0, 2, 1, 3, 4)


def conv_layers_ref(x, p):
    h = _ref_inflated(x, p["w1"], p["b1"], 2, 1, True)
    h = _ref_inflated(h, p["w2"], p["b2"], 2, 1, True)
    h = _ref_inflated(h, p["w3"], p["b3"], 2, 1, True)
    h = _ref_inflated(h, p["w4"], p["b4"], 1, 1, True)
    return h


def pose_conditioning_embedding_ref(x, p):
    h = conv_layers_ref(x, p)
    return _ref_inflated(h, p["wf"], p["bf"], 1, 0, False,
                         scale=p["scale"], out_dtype=jnp.float32)


# -------------------------------------------------------------------- main ---
if __name__ == "__main__":
    key = jax.random.PRNGKey(0)
    key, kx, kp = jax.random.split(key, 3)

    # small but representative shapes: batch=2, channels=3, frames=2, 16x16
    b, c, f, hgt, wdt = 2, 3, 2, 16, 16
    emb_channels = 8
    x = jax.random.normal(kx, (b, c, f, hgt, wdt), jnp.float32)

    params = init_params(kp, conditioning_embedding_channels=emb_channels)

    fwd = jax.jit(pose_conditioning_embedding_pallas)
    feats_fn = jax.jit(conv_layers_pallas)

    out = jax.block_until_ready(fwd(x, params))
    feats = jax.block_until_ready(feats_fn(x, params))

    # sanity: intermediate features (non-trivial weights) match the XLA reference
    feats_ref = conv_layers_ref(x, params)
    np.testing.assert_allclose(
        np.asarray(feats.astype(jnp.float32)),
        np.asarray(feats_ref.astype(jnp.float32)),
        rtol=1e-2, atol=1e-2)

    out_ref = pose_conditioning_embedding_ref(x, params)
    assert out.shape == (b, emb_channels, f, hgt // 8, wdt // 8)
    np.testing.assert_allclose(np.asarray(out), np.asarray(out_ref),
                               rtol=1e-2, atol=1e-2)

    print("KERNEL_OK")
</pallas_src>

<mosaic_0001>
module attributes {stable_mosaic.version = 11 : i64} {
  func.func @_matmul_bias_act_kernel(%arg0: i32, %arg1: memref<256x48xbf16, #tpu.memory_space<vmem>>, %arg2: memref<48x16xbf16, #tpu.memory_space<vmem>>, %arg3: memref<1x16xf32, #tpu.memory_space<vmem>>, %arg4: memref<256x16xbf16, #tpu.memory_space<vmem>>) attributes {dimension_semantics = [#tpu.dimension_semantics<parallel>], iteration_bounds = array<i64: 1>, scalar_prefetch = 0 : i64, scratch_operands = 0 : i64, tpu.core_type = #tpu.core_type<tc>, window_params = [{transform_indices = @transform_0, window_bounds = array<i64: 256, 48>}, {pipeline_mode = #tpu.pipeline_mode<synchronous>, transform_indices = @transform_1, window_bounds = array<i64: 48, 16>}, {pipeline_mode = #tpu.pipeline_mode<synchronous>, transform_indices = @transform_2, window_bounds = array<i64: 1, 16>}, {transform_indices = @transform_3, window_bounds = array<i64: 256, 16>}]} {
    %c0 = arith.constant 0 : index
    %c0_0 = arith.constant 0 : index
    %0 = vector.load %arg1[%c0, %c0_0] : memref<256x48xbf16, #tpu.memory_space<vmem>>, vector<256x48xbf16>
    %c0_1 = arith.constant 0 : index
    %c0_2 = arith.constant 0 : index
    %1 = vector.load %arg2[%c0_1, %c0_2] : memref<48x16xbf16, #tpu.memory_space<vmem>>, vector<48x16xbf16>
    %cst = arith.constant dense<0.000000e+00> : vector<256x16xf32>
    %2 = tpu.matmul %0, %1, %cst {dimension_numbers = #tpu.dot_dimension_numbers<[1], [0], [0], [1], [0, 0, 1, 1], [], []>} : vector<256x48xbf16>, vector<48x16xbf16>, vector<256x16xf32> -> vector<256x16xf32>
    %c0_3 = arith.constant 0 : index
    %c0_4 = arith.constant 0 : index
    %3 = vector.load %arg3[%c0_3, %c0_4] : memref<1x16xf32, #tpu.memory_space<vmem>>, vector<1x16xf32>
    %4 = vector.broadcast %3 : vector<1x16xf32> to vector<256x16xf32>
    %5 = arith.addf %2, %4 : vector<256x16xf32>
    %6 = arith.negf %5 : vector<256x16xf32>
    %7 = math.exp %6 : vector<256x16xf32>
    %cst_5 = arith.constant 1.000000e+00 : f32
    %8 = vector.broadcast %cst_5 : f32 to vector<256x16xf32>
    %9 = arith.addf %8, %7 : vector<256x16xf32>
    %10 = arith.divf %8, %9 : vector<256x16xf32>
    %11 = arith.mulf %5, %10 : vector<256x16xf32>
    %12 = arith.truncf %11 : vector<256x16xf32> to vector<256x16xbf16>
    %c0_6 = arith.constant 0 : index
    %c0_7 = arith.constant 0 : index
    %13 = vector.load %arg4[%c0_6, %c0_7] : memref<256x16xbf16, #tpu.memory_space<vmem>>, vector<256x16xbf16>
    tpu.vector_store %arg4[%c0_6, %c0_7], %12 {strides = array<i32>} : memref<256x16xbf16, #tpu.memory_space<vmem>>, vector<256x16xbf16>,
    return
  }
  func.func @transform_0(%arg0: i32) -> (i32, i32) {
    %c0_i32 = arith.constant 0 : i32
    %c0_i32_0 = arith.constant 0 : i32
    return %arg0, %c0_i32 : i32, i32
  }
  func.func @transform_1(%arg0: i32) -> (i32, i32) {
    %c0_i32 = arith.constant 0 : i32
    %c0_i32_0 = arith.constant 0 : i32
    %c0_i32_1 = arith.constant 0 : i32
    return %c0_i32, %c0_i32_0 : i32, i32
  }
  func.func @transform_2(%arg0: i32) -> (i32, i32) {
    %c0_i32 = arith.constant 0 : i32
    %c0_i32_0 = arith.constant 0 : i32
    %c0_i32_1 = arith.constant 0 : i32
    return %c0_i32, %c0_i32_0 : i32, i32
  }
  func.func @transform_3(%arg0: i32) -> (i32, i32) {
    %c0_i32 = arith.constant 0 : i32
    %c0_i32_0 = arith.constant 0 : i32
    return %arg0, %c0_i32 : i32, i32
  }
}

module attributes {stable_mosaic.version = 11 : i64} {
  func.func @_matmul_bias_act_kernel(%arg0: i32, %arg1: memref<64x256xbf16, #tpu.memory_space<vmem>>, %arg2: memref<256x32xbf16, #tpu.memory_space<vmem>>, %arg3: memref<1x32xf32, #tpu.memory_space<vmem>>, %arg4: memref<64x32xbf16, #tpu.memory_space<vmem>>) attributes {dimension_semantics = [#tpu.dimension_semantics<parallel>], iteration_bounds = array<i64: 1>, scalar_prefetch = 0 : i64, scratch_operands = 0 : i64, tpu.core_type = #tpu.core_type<tc>, window_params = [{transform_indices = @transform_0, window_bounds = array<i64: 64, 256>}, {pipeline_mode = #tpu.pipeline_mode<synchronous>, transform_indices = @transform_1, window_bounds = array<i64: 256, 32>}, {pipeline_mode = #tpu.pipeline_mode<synchronous>, transform_indices = @transform_2, window_bounds = array<i64: 1, 32>}, {transform_indices = @transform_3, window_bounds = array<i64: 64, 32>}]} {
    %c0 = arith.constant 0 : index
    %c0_0 = arith.constant 0 : index
    %0 = vector.load %arg1[%c0, %c0_0] : memref<64x256xbf16, #tpu.memory_space<vmem>>, vector<64x256xbf16>
    %c0_1 = arith.constant 0 : index
    %c0_2 = arith.constant 0 : index
    %1 = vector.load %arg2[%c0_1, %c0_2] : memref<256x32xbf16, #tpu.memory_space<vmem>>, vector<256x32xbf16>
    %cst = arith.constant dense<0.000000e+00> : vector<64x32xf32>
    %2 = tpu.matmul %0, %1, %cst {dimension_numbers = #tpu.dot_dimension_numbers<[1], [0], [0], [1], [0, 0, 1, 1], [], []>} : vector<64x256xbf16>, vector<256x32xbf16>, vector<64x32xf32> -> vector<64x32xf32>
    %c0_3 = arith.constant 0 : index
    %c0_4 = arith.constant 0 : index
    %3 = vector.load %arg3[%c0_3, %c0_4] : memref<1x32xf32, #tpu.memory_space<vmem>>, vector<1x32xf32>
    %4 = vector.broadcast %3 : vector<1x32xf32> to vector<64x32xf32>
    %5 = arith.addf %2, %4 : vector<64x32xf32>
    %6 = arith.negf %5 : vector<64x32xf32>
    %7 = math.exp %6 : vector<64x32xf32>
    %cst_5 = arith.constant 1.000000e+00 : f32
    %8 = vector.broadcast %cst_5 : f32 to vector<64x32xf32>
    %9 = arith.addf %8, %7 : vector<64x32xf32>
    %10 = arith.divf %8, %9 : vector<64x32xf32>
    %11 = arith.mulf %5, %10 : vector<64x32xf32>
    %12 = arith.truncf %11 : vector<64x32xf32> to vector<64x32xbf16>
    %c0_6 = arith.constant 0 : index
    %c0_7 = arith.constant 0 : index
    %13 = vector.load %arg4[%c0_6, %c0_7] : memref<64x32xbf16, #tpu.memory_space<vmem>>, vector<64x32xbf16>
    tpu.vector_store %arg4[%c0_6, %c0_7], %12 {strides = array<i32>} : memref<64x32xbf16, #tpu.memory_space<vmem>>, vector<64x32xbf16>,
    return
  }
  func.func @transform_0(%arg0: i32) -> (i32, i32) {
    %c0_i32 = arith.constant 0 : i32
    %c0_i32_0 = arith.constant 0 : i32
    return %arg0, %c0_i32 : i32, i32
  }
  func.func @transform_1(%arg0: i32) -> (i32, i32) {
    %c0_i32 = arith.constant 0 : i32
    %c0_i32_0 = arith.constant 0 : i32
    %c0_i32_1 = arith.constant 0 : i32
    return %c0_i32, %c0_i32_0 : i32, i32
  }
  func.func @transform_2(%arg0: i32) -> (i32, i32) {
    %c0_i32 = arith.constant 0 : i32
    %c0_i32_0 = arith.constant 0 : i32
    %c0_i32_1 = arith.constant 0 : i32
    return %c0_i32, %c0_i32_0 : i32, i32
  }
  func.func @transform_3(%arg0: i32) -> (i32, i32) {
    %c0_i32 = arith.constant 0 : i32
    %c0_i32_0 = arith.constant 0 : i32
    return %arg0, %c0_i32 : i32, i32
  }
}

module attributes {stable_mosaic.version = 11 : i64} {
  func.func @_matmul_bias_act_kernel(%arg0: i32, %arg1: memref<16x512xbf16, #tpu.memory_space<vmem>>, %arg2: memref<512x64xbf16, #tpu.memory_space<vmem>>, %arg3: memref<1x64xf32, #tpu.memory_space<vmem>>, %arg4: memref<16x64xbf16, #tpu.memory_space<vmem>>) attributes {dimension_semantics = [#tpu.dimension_semantics<parallel>], iteration_bounds = array<i64: 1>, scalar_prefetch = 0 : i64, scratch_operands = 0 : i64, tpu.core_type = #tpu.core_type<tc>, window_params = [{transform_indices = @transform_0, window_bounds = array<i64: 16, 512>}, {pipeline_mode = #tpu.pipeline_mode<synchronous>, transform_indices = @transform_1, window_bounds = array<i64: 512, 64>}, {pipeline_mode = #tpu.pipeline_mode<synchronous>, transform_indices = @transform_2, window_bounds = array<i64: 1, 64>}, {transform_indices = @transform_3, window_bounds = array<i64: 16, 64>}]} {
    %c0 = arith.constant 0 : index
    %c0_0 = arith.constant 0 : index
    %0 = vector.load %arg1[%c0, %c0_0] : memref<16x512xbf16, #tpu.memory_space<vmem>>, vector<16x512xbf16>
    %c0_1 = arith.constant 0 : index
    %c0_2 = arith.constant 0 : index
    %1 = vector.load %arg2[%c0_1, %c0_2] : memref<512x64xbf16, #tpu.memory_space<vmem>>, vector<512x64xbf16>
    %cst = arith.constant dense<0.000000e+00> : vector<16x64xf32>
    %2 = tpu.matmul %0, %1, %cst {dimension_numbers = #tpu.dot_dimension_numbers<[1], [0], [0], [1], [0, 0, 1, 1], [], []>} : vector<16x512xbf16>, vector<512x64xbf16>, vector<16x64xf32> -> vector<16x64xf32>
    %c0_3 = arith.constant 0 : index
    %c0_4 = arith.constant 0 : index
    %3 = vector.load %arg3[%c0_3, %c0_4] : memref<1x64xf32, #tpu.memory_space<vmem>>, vector<1x64xf32>
    %4 = vector.broadcast %3 : vector<1x64xf32> to vector<16x64xf32>
    %5 = arith.addf %2, %4 : vector<16x64xf32>
    %6 = arith.negf %5 : vector<16x64xf32>
    %7 = math.exp %6 : vector<16x64xf32>
    %cst_5 = arith.constant 1.000000e+00 : f32
    %8 = vector.broadcast %cst_5 : f32 to vector<16x64xf32>
    %9 = arith.addf %8, %7 : vector<16x64xf32>
    %10 = arith.divf %8, %9 : vector<16x64xf32>
    %11 = arith.mulf %5, %10 : vector<16x64xf32>
    %12 = arith.truncf %11 : vector<16x64xf32> to vector<16x64xbf16>
    %c0_6 = arith.constant 0 : index
    %c0_7 = arith.constant 0 : index
    %13 = vector.load %arg4[%c0_6, %c0_7] : memref<16x64xbf16, #tpu.memory_space<vmem>>, vector<16x64xbf16>
    tpu.vector_store %arg4[%c0_6, %c0_7], %12 {strides = array<i32>} : memref<16x64xbf16, #tpu.memory_space<vmem>>, vector<16x64xbf16>,
    return
  }
  func.func @transform_0(%arg0: i32) -> (i32, i32) {
    %c0_i32 = arith.constant 0 : i32
    %c0_i32_0 = arith.constant 0 : i32
    return %arg0, %c0_i32 : i32, i32
  }
  func.func @transform_1(%arg0: i32) -> (i32, i32) {
    %c0_i32 = arith.constant 0 : i32
    %c0_i32_0 = arith.constant 0 : i32
    %c0_i32_1 = arith.constant 0 : i32
    return %c0_i32, %c0_i32_0 : i32, i32
  }
  func.func @transform_2(%arg0: i32) -> (i32, i32) {
    %c0_i32 = arith.constant 0 : i32
    %c0_i32_0 = arith.constant 0 : i32
    %c0_i32_1 = arith.constant 0 : i32
    return %c0_i32, %c0_i32_0 : i32, i32
  }
  func.func @transform_3(%arg0: i32) -> (i32, i32) {
    %c0_i32 = arith.constant 0 : i32
    %c0_i32_0 = arith.constant 0 : i32
    return %arg0, %c0_i32 : i32, i32
  }
}

module attributes {stable_mosaic.version = 11 : i64} {
  func.func @_conv4_final_fused_kernel(%arg0: i32, %arg1: memref<16x576xbf16, #tpu.memory_space<vmem>>, %arg2: memref<576x128xbf16, #tpu.memory_space<vmem>>, %arg3: memref<1x128xf32, #tpu.memory_space<vmem>>, %arg4: memref<128x8xbf16, #tpu.memory_space<vmem>>, %arg5: memref<1x8xf32, #tpu.memory_space<vmem>>, %arg6: memref<1xf32, #tpu.memory_space<smem>>, %arg7: memref<16x8xf32, #tpu.memory_space<vmem>>) attributes {dimension_semantics = [#tpu.dimension_semantics<parallel>], iteration_bounds = array<i64: 1>, scalar_prefetch = 0 : i64, scratch_operands = 0 : i64, tpu.core_type = #tpu.core_type<tc>, window_params = [{transform_indices = @transform_0, window_bounds = array<i64: 16, 576>}, {pipeline_mode = #tpu.pipeline_mode<synchronous>, transform_indices = @transform_1, window_bounds = array<i64: 576, 128>}, {pipeline_mode = #tpu.pipeline_mode<synchronous>, transform_indices = @transform_2, window_bounds = array<i64: 1, 128>}, {pipeline_mode = #tpu.pipeline_mode<synchronous>, transform_indices = @transform_3, window_bounds = array<i64: 128, 8>}, {pipeline_mode = #tpu.pipeline_mode<synchronous>, transform_indices = @transform_4, window_bounds = array<i64: 1, 8>}, {transform_indices = @transform_5, window_bounds = array<i64: 1>}, {transform_indices = @transform_6, window_bounds = array<i64: 16, 8>}]} {
    %c0 = arith.constant 0 : index
    %c0_0 = arith.constant 0 : index
    %0 = vector.load %arg1[%c0, %c0_0] : memref<16x576xbf16, #tpu.memory_space<vmem>>, vector<16x576xbf16>
    %c0_1 = arith.constant 0 : index
    %c0_2 = arith.constant 0 : index
    %1 = vector.load %arg2[%c0_1, %c0_2] : memref<576x128xbf16, #tpu.memory_space<vmem>>, vector<576x128xbf16>
    %cst = arith.constant dense<0.000000e+00> : vector<16x128xf32>
    %2 = tpu.matmul %0, %1, %cst {dimension_numbers = #tpu.dot_dimension_numbers<[1], [0], [0], [1], [0, 0, 1, 1], [], []>} : vector<16x576xbf16>, vector<576x128xbf16>, vector<16x128xf32> -> vector<16x128xf32>
    %c0_3 = arith.constant 0 : index
    %c0_4 = arith.constant 0 : index
    %3 = vector.load %arg3[%c0_3, %c0_4] : memref<1x128xf32, #tpu.memory_space<vmem>>, vector<1x128xf32>
    %4 = vector.broadcast %3 : vector<1x128xf32> to vector<16x128xf32>
    %5 = arith.addf %2, %4 : vector<16x128xf32>
    %6 = arith.negf %5 : vector<16x128xf32>
    %7 = math.exp %6 : vector<16x128xf32>
    %cst_5 = arith.constant 1.000000e+00 : f32
    %8 = vector.broadcast %cst_5 : f32 to vector<16x128xf32>
    %9 = arith.addf %8, %7 : vector<16x128xf32>
    %10 = arith.divf %8, %9 : vector<16x128xf32>
    %11 = arith.mulf %5, %10 : vector<16x128xf32>
    %12 = arith.truncf %11 : vector<16x128xf32> to vector<16x128xbf16>
    %c0_6 = arith.constant 0 : index
    %c0_7 = arith.constant 0 : index
    %13 = vector.load %arg4[%c0_6, %c0_7] : memref<128x8xbf16, #tpu.memory_space<vmem>>, vector<128x8xbf16>
    %cst_8 = arith.constant dense<0.000000e+00> : vector<16x8xf32>
    %14 = tpu.matmul %12, %13, %cst_8 {dimension_numbers = #tpu.dot_dimension_numbers<[1], [0], [0], [1], [0, 0, 1, 1], [], []>} : vector<16x128xbf16>, vector<128x8xbf16>, vector<16x8xf32> -> vector<16x8xf32>
    %c0_9 = arith.constant 0 : index
    %c0_10 = arith.constant 0 : index
    %15 = vector.load %arg5[%c0_9, %c0_10] : memref<1x8xf32, #tpu.memory_space<vmem>>, vector<1x8xf32>
    %16 = vector.broadcast %15 : vector<1x8xf32> to vector<16x8xf32>
    %17 = arith.addf %14, %16 : vector<16x8xf32>
    %c0_11 = arith.constant 0 : index
    %18 = memref.load %arg6[%c0_11] : memref<1xf32, #tpu.memory_space<smem>>
    %19 = vector.broadcast %18 : f32 to vector<16x8xf32>
    %20 = arith.mulf %17, %19 : vector<16x8xf32>
    %c0_12 = arith.constant 0 : index
    %c0_13 = arith.constant 0 : index
    %21 = vector.load %arg7[%c0_12, %c0_13] : memref<16x8xf32, #tpu.memory_space<vmem>>, vector<16x8xf32>
    tpu.vector_store %arg7[%c0_12, %c0_13], %20 {strides = array<i32>} : memref<16x8xf32, #tpu.memory_space<vmem>>, vector<16x8xf32>,
    return
  }
  func.func @transform_0(%arg0: i32) -> (i32, i32) {
    %c0_i32 = arith.constant 0 : i32
    %c0_i32_0 = arith.constant 0 : i32
    return %arg0, %c0_i32 : i32, i32
  }
  func.func @transform_1(%arg0: i32) -> (i32, i32) {
    %c0_i32 = arith.constant 0 : i32
    %c0_i32_0 = arith.constant 0 : i32
    %c0_i32_1 = arith.constant 0 : i32
    return %c0_i32, %c0_i32_0 : i32, i32
  }
  func.func @transform_2(%arg0: i32) -> (i32, i32) {
    %c0_i32 = arith.constant 0 : i32
    %c0_i32_0 = arith.constant 0 : i32
    %c0_i32_1 = arith.constant 0 : i32
    return %c0_i32, %c0_i32_0 : i32, i32
  }
  func.func @transform_3(%arg0: i32) -> (i32, i32) {
    %c0_i32 = arith.constant 0 : i32
    %c0_i32_0 = arith.constant 0 : i32
    %c0_i32_1 = arith.constant 0 : i32
    return %c0_i32, %c0_i32_0 : i32, i32
  }
  func.func @transform_4(%arg0: i32) -> (i32, i32) {
    %c0_i32 = arith.constant 0 : i32
    %c0_i32_0 = arith.constant 0 : i32
    %c0_i32_1 = arith.constant 0 : i32
    return %c0_i32, %c0_i32_0 : i32, i32
  }
  func.func @transform_5(%arg0: i32) -> i32 {
    %c0_i32 = arith.constant 0 : i32
    %c0_i32_0 = arith.constant 0 : i32
    return %c0_i32 : i32
  }
  func.func @transform_6(%arg0: i32) -> (i32, i32) {
    %c0_i32 = arith.constant 0 : i32
    %c0_i32_0 = arith.constant 0 : i32
    return %arg0, %c0_i32 : i32, i32
  }
}

</mosaic_0001>

<llo_original>
// kernel: pose_conditioning_embedding_pallas.4
$region0: #{pose_conditioning_embedding_pallas.4}
  #allocation0 [shape = 'u32[]', space=smem, size = 0x4, offset = 0x4, fixed_abs, tag = 'smem constant byte address 0x4 - core index']
  #allocation1 [shape = 'u32[72,128]{1,0:T(1,128)}', space=vmem, size = 0x9000, scoped, tag = 'internal scratch']
  %s0 = inlined_call_operand.vmem [shape: bf16[256,48], index: 0, kind: input, shape index: {}]
  %s1 = inlined_call_operand.vmem [shape: bf16[48,16], index: 1, kind: input, shape index: {}]
  %s2 = inlined_call_operand.vmem [shape: f32[1,16], index: 2, kind: input, shape index: {}]
  %s3 = inlined_call_operand.vmem [shape: bf16[256,16], index: 3, kind: output, shape index: {}]
  %s4 = sld [smem:[#allocation0]]
  $region22: #{pose_conditioning_embedding_pallas.4} parent=0
    _
  %s6 = ssub.s32 1, %s4
  %s7 = scalar_select 0, %s6, %s4
  // Predicated region
  $region2: #{pose_conditioning_embedding_pallas.4} parent=0 // pred_check
    _
  $region3: #{pose_conditioning_embedding_pallas.4} parent=0 // pred_check_branch
    %9 = sbr.rel (0) target = $region5
  $region4: #{pose_conditioning_embedding_pallas.4} parent=0 // pred_region
    _
  $region5: #{pose_conditioning_embedding_pallas.4} parent=0 // pred_fallthru
    _
  // Predicated region
  $region6: #{pose_conditioning_embedding_pallas.4} parent=0 // pred_check
    _
  $region7: #{pose_conditioning_embedding_pallas.4} parent=0 // pred_check_branch
    %11 = sbr.rel (0) target = $region9
  $region8: #{pose_conditioning_embedding_pallas.4} parent=0 // pred_region
    _
  $region9: #{pose_conditioning_embedding_pallas.4} parent=0 // pred_fallthru
    _
  // Predicated region
  $region10: #{pose_conditioning_embedding_pallas.4} parent=0 // pred_check
    _
  $region11: #{pose_conditioning_embedding_pallas.4} parent=0 // pred_check_branch
    %13 = sbr.rel (0) target = $region13
  $region12: #{pose_conditioning_embedding_pallas.4} parent=0 // pred_region
    _
  $region13: #{pose_conditioning_embedding_pallas.4} parent=0 // pred_fallthru
    _
  %v15 = vld [vmem:[%s0] sm:$0xf]
  %v16 = vld [vmem:[%s0 + $0x4] sm:$0xf]
  %v17 = vld [vmem:[%s0 + $0x8] sm:$0xf]
  %v18 = vld [vmem:[%s0 + $0xc] sm:$0xf]
  %v19 = vld [vmem:[%s0 + $0x10] sm:$0xf]
  %v20 = vld [vmem:[%s0 + $0x14] sm:$0xf]
  %v21 = vld [vmem:[%s0 + $0x18] sm:$0xf]
  %v22 = vld [vmem:[%s0 + $0x1c] sm:$0xf]
  %v23 = vld [vmem:[%s0 + $0x20] sm:$0xf]
  %v24 = vld [vmem:[%s0 + $0x24] sm:$0xf]
  %v25 = vld [vmem:[%s0 + $0x28] sm:$0xf]
  %v26 = vld [vmem:[%s0 + $0x2c] sm:$0xf]
  %v27 = vld [vmem:[%s0 + $0x30] sm:$0xf]
  %v28 = vld [vmem:[%s0 + $0x34] sm:$0xf]
  %v29 = vld [vmem:[%s0 + $0x38] sm:$0xf]
  %v30 = vld [vmem:[%s0 + $0x3c] sm:$0xf]
  %v31 = vld [vmem:[%s0 + $0x40] sm:$0xf]
  %v32 = vld [vmem:[%s0 + $0x44] sm:$0xf]
  %v33 = vld [vmem:[%s0 + $0x48] sm:$0xf]
  %v34 = vld [vmem:[%s0 + $0x4c] sm:$0xf]
  %v35 = vld [vmem:[%s0 + $0x50] sm:$0xf]
  %v36 = vld [vmem:[%s0 + $0x54] sm:$0xf]
  %v37 = vld [vmem:[%s0 + $0x58] sm:$0xf]
  %v38 = vld [vmem:[%s0 + $0x5c] sm:$0xf]
  %v39 = vld [vmem:[%s0 + $0x60] sm:$0xf]
  %v40 = vld [vmem:[%s0 + $0x64] sm:$0xf]
  %v41 = vld [vmem:[%s0 + $0x68] sm:$0xf]
  %v42 = vld [vmem:[%s0 + $0x6c] sm:$0xf]
  %v43 = vld [vmem:[%s0 + $0x70] sm:$0xf]
  %v44 = vld [vmem:[%s0 + $0x74] sm:$0xf]
  %v45 = vld [vmem:[%s0 + $0x78] sm:$0xf]
  %v46 = vld [vmem:[%s0 + $0x7c] sm:$0xf]
  %v47 = vld [vmem:[%s1] sm:$0xf]
  %v48 = vld [vmem:[%s1 + $0x4] sm:$0xf]
  %v49 = vld [vmem:[%s1 + $0x8] sm:$0xf]
  %v50 = vld [vmem:[%s1 + $0xc] sm:$0xf]
  %v51 = vld [vmem:[%s1 + $0x10] sm:$0xf]
  %v52 = vld [vmem:[%s1 + $0x14] sm:$0xf]
  %v53 = vld [vmem:[%s2] sm:$0x1]
  %v55 = vperm.slane %v53, 0
  %v89 = vunpack.c.l.b16 %v15
  %v90 = vunpack.c.l.b16 %v16
  %v91 = vunpack.c.l.b16 %v17
  %v92 = vunpack.c.l.b16 %v18
  %v93 = vunpack.c.l.b16 %v19
  %v94 = vunpack.c.l.b16 %v20
  %v95 = vunpack.c.l.b16 %v21
  %v96 = vunpack.c.l.b16 %v22
  %v97 = vunpack.c.l.b16 %v23
  %v98 = vunpack.c.l.b16 %v24
  %v99 = vunpack.c.l.b16 %v25
  %v100 = vunpack.c.l.b16 %v26
  %v101 = vunpack.c.l.b16 %v27
  %v102 = vunpack.c.l.b16 %v28
  %v103 = vunpack.c.l.b16 %v29
  %v104 = vunpack.c.l.b16 %v30
  %v105 = vunpack.c.l.b16 %v31
  %v106 = vunpack.c.l.b16 %v32
  %v107 = vunpack.c.l.b16 %v33
  %v108 = vunpack.c.l.b16 %v34
  %v109 = vunpack.c.l.b16 %v35
  %v110 = vunpack.c.l.b16 %v36
  %v111 = vunpack.c.l.b16 %v37
  %v112 = vunpack.c.l.b16 %v38
  %v113 = vunpack.c.l.b16 %v39
  %v114 = vunpack.c.l.b16 %v40
  %v115 = vunpack.c.l.b16 %v41
  %v116 = vunpack.c.l.b16 %v42
  %v117 = vunpack.c.l.b16 %v43
  %v118 = vunpack.c.l.b16 %v44
  %v119 = vunpack.c.l.b16 %v45
  %v120 = vunpack.c.l.b16 %v46
  %v121 = vpack.c.b16 %v90, %v89
  %v122 = vpack.c.b16 %v92, %v91
  %v123 = vpack.c.b16 %v94, %v93
  %v124 = vpack.c.b16 %v96, %v95
  %v125 = vpack.c.b16 %v98, %v97
  %v126 = vpack.c.b16 %v100, %v99
  %v127 = vpack.c.b16 %v102, %v101
  %v128 = vpack.c.b16 %v104, %v103
  %v129 = vpack.c.b16 %v106, %v105
  %v130 = vpack.c.b16 %v108, %v107
  %v131 = vpack.c.b16 %v110, %v109
  %v132 = vpack.c.b16 %v112, %v111
  %v133 = vpack.c.b16 %v114, %v113
  %v134 = vpack.c.b16 %v116, %v115
  %v135 = vpack.c.b16 %v118, %v117
  %v136 = vpack.c.b16 %v120, %v119
  %v143 = vunpack.c.l.b16 %v47
  %v144 = vunpack.c.l.b16 %v48
  %v145 = vunpack.c.l.b16 %v49
  %v146 = vunpack.c.l.b16 %v50
  %v147 = vunpack.c.l.b16 %v51
  %v148 = vunpack.c.l.b16 %v52
  %v149 = vpack.c.b16 %v144, %v143
  %v150 = vpack.c.b16 %v146, %v145
  %v151 = vpack.c.b16 %v148, %v147
  %vm155 = vcmask 392192
  %v157 = vsel %vm155, %v121, 0
  %v160 = vsel %vm155, %v122, 0
  %v163 = vsel %vm155, %v123, 0
  %v166 = vsel %vm155, %v124, 0
  %v169 = vsel %vm155, %v125, 0
  %v172 = vsel %vm155, %v126, 0
  %v175 = vsel %vm155, %v127, 0
  %v178 = vsel %vm155, %v128, 0
  %v181 = vsel %vm155, %v129, 0
  %v184 = vsel %vm155, %v130, 0
  %v187 = vsel %vm155, %v131, 0
  %v190 = vsel %vm155, %v132, 0
  %v193 = vsel %vm155, %v133, 0
  %v196 = vsel %vm155, %v134, 0
  %v199 = vsel %vm155, %v135, 0
  %v202 = vsel %vm155, %v136, 0
  %204 = vmatpush.bf16.msra.mxu0 0
  %205 = vmatpush.bf16.msra.mxu0 0
  %206 = vmatpush.bf16.msra.mxu0 0
  %207 = vmatpush.bf16.msra.mxu0 0
  %208 = vmatpush.bf16.msra.mxu0 0
  %209 = vmatpush.bf16.msra.mxu0 %v151
  %210 = vmatpush.bf16.msra.mxu0 %v150
  %211 = vmatpush.bf16.msra.mxu0 %v149
  %212 = vmatmul.bf16.gmra.mxu0 %v157
  %v213 = vpop.f32.mrf.mxu0
  %v214 = vadd.f32 %v55, %v213
  %v215 = vpop.f32.mrf.mxu0
  %v216 = vadd.f32 %v55, %v215
  %217 = vmatmul.bf16.gmra.mxu0 %v160
  %v218 = vpop.f32.mrf.mxu0
  %v219 = vadd.f32 %v55, %v218
  %v220 = vpop.f32.mrf.mxu0
  %v221 = vadd.f32 %v55, %v220
  %222 = vmatmul.bf16.gmra.mxu0 %v163
  %v223 = vpop.f32.mrf.mxu0
  %v224 = vadd.f32 %v55, %v223
  %v225 = vpop.f32.mrf.mxu0
  %v226 = vadd.f32 %v55, %v225
  %227 = vmatmul.bf16.gmra.mxu0 %v166
  %v228 = vpop.f32.mrf.mxu0
  %v229 = vadd.f32 %v55, %v228
  %v230 = vpop.f32.mrf.mxu0
  %v231 = vadd.f32 %v55, %v230
  %232 = vmatmul.bf16.gmra.mxu0 %v169
  %v233 = vpop.f32.mrf.mxu0
  %v234 = vadd.f32 %v55, %v233
  %v235 = vpop.f32.mrf.mxu0
  %v236 = vadd.f32 %v55, %v235
  %237 = vmatmul.bf16.gmra.mxu0 %v172
  %v238 = vpop.f32.mrf.mxu0
  %v239 = vadd.f32 %v55, %v238
  %v240 = vpop.f32.mrf.mxu0
  %v241 = vadd.f32 %v55, %v240
  %242 = vmatmul.bf16.gmra.mxu0 %v175
  %v243 = vpop.f32.mrf.mxu0
  %v244 = vadd.f32 %v55, %v243
  %v245 = vpop.f32.mrf.mxu0
  %v246 = vadd.f32 %v55, %v245
  %247 = vmatmul.bf16.gmra.mxu0 %v178
  %v248 = vpop.f32.mrf.mxu0
  %v249 = vadd.f32 %v55, %v248
  %v250 = vpop.f32.mrf.mxu0
  %v251 = vadd.f32 %v55, %v250
  %252 = vmatmul.bf16.gmra.mxu0 %v181
  %v253 = vpop.f32.mrf.mxu0
  %v254 = vadd.f32 %v55, %v253
  %v255 = vpop.f32.mrf.mxu0
  %v256 = vadd.f32 %v55, %v255
  %257 = vmatmul.bf16.gmra.mxu0 %v184
  %v258 = vpop.f32.mrf.mxu0
  %v259 = vadd.f32 %v55, %v258
  %v260 = vpop.f32.mrf.mxu0
  %v261 = vadd.f32 %v55, %v260
  %262 = vmatmul.bf16.gmra.mxu0 %v187
  %v263 = vpop.f32.mrf.mxu0
  %v264 = vadd.f32 %v55, %v263
  %v265 = vpop.f32.mrf.mxu0
  %v266 = vadd.f32 %v55, %v265
  %267 = vmatmul.bf16.gmra.mxu0 %v190
  %v268 = vpop.f32.mrf.mxu0
  %v269 = vadd.f32 %v55, %v268
  %v270 = vpop.f32.mrf.mxu0
  %v271 = vadd.f32 %v55, %v270
  %272 = vmatmul.bf16.gmra.mxu0 %v193
  %v273 = vpop.f32.mrf.mxu0
  %v274 = vadd.f32 %v55, %v273
  %v275 = vpop.f32.mrf.mxu0
  %v276 = vadd.f32 %v55, %v275
  %277 = vmatmul.bf16.gmra.mxu0 %v196
  %v278 = vpop.f32.mrf.mxu0
  %v279 = vadd.f32 %v55, %v278
  %v280 = vpop.f32.mrf.mxu0
  %v281 = vadd.f32 %v55, %v280
  %282 = vmatmul.bf16.gmra.mxu0 %v199
  %v283 = vpop.f32.mrf.mxu0
  %v284 = vadd.f32 %v55, %v283
  %v285 = vpop.f32.mrf.mxu0
  %v286 = vadd.f32 %v55, %v285
  %287 = vmatmul.bf16.gmra.mxu0 %v202
  %v288 = vpop.f32.mrf.mxu0
  %v289 = vadd.f32 %v55, %v288
  %v290 = vpop.f32.mrf.mxu0
  %v291 = vadd.f32 %v55, %v290
  %292 = vdwg.mxu0
  %v293 = vxor.u32 %v214, 2147483648
  %v294 = vxor.u32 %v216, 2147483648
  %v295 = vxor.u32 %v219, 2147483648
  %v296 = vxor.u32 %v221, 2147483648
  %v297 = vxor.u32 %v224, 2147483648
  %v298 = vxor.u32 %v226, 2147483648
  %v299 = vxor.u32 %v229, 2147483648
  %v300 = vxor.u32 %v231, 2147483648
  %v301 = vxor.u32 %v234, 2147483648
  %v302 = vxor.u32 %v236, 2147483648
  %v303 = vxor.u32 %v239, 2147483648
  %v304 = vxor.u32 %v241, 2147483648
  %v305 = vxor.u32 %v244, 2147483648
  %v306 = vxor.u32 %v246, 2147483648
  %v307 = vxor.u32 %v249, 2147483648
  %v308 = vxor.u32 %v251, 2147483648
  %v309 = vxor.u32 %v254, 2147483648
  %v310 = vxor.u32 %v256, 2147483648
  %v311 = vxor.u32 %v259, 2147483648
  %v312 = vxor.u32 %v261, 2147483648
  %v313 = vxor.u32 %v264, 2147483648
  %v314 = vxor.u32 %v266, 2147483648
  %v315 = vxor.u32 %v269, 2147483648
  %v316 = vxor.u32 %v271, 2147483648
  %v317 = vxor.u32 %v274, 2147483648
  %v318 = vxor.u32 %v276, 2147483648
  %v319 = vxor.u32 %v279, 2147483648
  %v320 = vxor.u32 %v281, 2147483648
  %v321 = vxor.u32 %v284, 2147483648
  %v322 = vxor.u32 %v286, 2147483648
  %v323 = vxor.u32 %v289, 2147483648
  %v324 = vxor.u32 %v291, 2147483648
  %v325 = vmul.f32 %v293, 1.442695
  %v326 = vpow.pop %v325
  %v327 = vmul.f32 %v294, 1.442695
  %v328 = vpow.pop %v327
  %v329 = vmul.f32 %v295, 1.442695
  %v330 = vpow.pop %v329
  %v331 = vmul.f32 %v296, 1.442695
  %v332 = vpow.pop %v331
  %v333 = vmul.f32 %v297, 1.442695
  %v334 = vpow.pop %v333
  %v335 = vmul.f32 %v298, 1.442695
  %v336 = vpow.pop %v335
  %v337 = vmul.f32 %v299, 1.442695
  %v338 = vpow.pop %v337
  %v339 = vmul.f32 %v300, 1.442695
  %v340 = vpow.pop %v339
  %v341 = vmul.f32 %v301, 1.442695
  %v342 = vpow.pop %v341
  %v343 = vmul.f32 %v302, 1.442695
  %v344 = vpow.pop %v343
  %v345 = vmul.f32 %v303, 1.442695
  %v346 = vpow.pop %v345
  %v347 = vmul.f32 %v304, 1.442695
  %v348 = vpow.pop %v347
  %v349 = vmul.f32 %v305, 1.442695
  %v350 = vpow.pop %v349
  %v351 = vmul.f32 %v306, 1.442695
  %v352 = vpow.pop %v351
  %v353 = vmul.f32 %v307, 1.442695
  %v354 = vpow.pop %v353
  %v355 = vmul.f32 %v308, 1.442695
  %v356 = vpow.pop %v355
  %v357 = vmul.f32 %v309, 1.442695
  %v358 = vpow.pop %v357
  %v359 = vmul.f32 %v310, 1.442695
  %v360 = vpow.pop %v359
  %v361 = vmul.f32 %v311, 1.442695
  %v362 = vpow.pop %v361
  %v363 = vmul.f32 %v312, 1.442695
  %v364 = vpow.pop %v363
  %v365 = vmul.f32 %v313, 1.442695
  %v366 = vpow.pop %v365
  %v367 = vmul.f32 %v314, 1.442695
  %v368 = vpow.pop %v367
  %v369 = vmul.f32 %v315, 1.442695
  %v370 = vpow.pop %v369
  %v371 = vmul.f32 %v316, 1.442695
  %v372 = vpow.pop %v371
  %v373 = vmul.f32 %v317, 1.442695
  %v374 = vpow.pop %v373
  %v375 = vmul.f32 %v318, 1.442695
  %v376 = vpow.pop %v375
  %v377 = vmul.f32 %v319, 1.442695
  %v378 = vpow.pop %v377
  %v379 = vmul.f32 %v320, 1.442695
  %v380 = vpow.pop %v379
  %v381 = vmul.f32 %v321, 1.442695
  %v382 = vpow.pop %v381
  %v383 = vmul.f32 %v322, 1.442695
  %v384 = vpow.pop %v383
  %v385 = vmul.f32 %v323, 1.442695
  %v386 = vpow.pop %v385
  %v387 = vmul.f32 %v324, 1.442695
  %v388 = vpow.pop %v387
  %v389 = vadd.f32 %v326, 1.0
  %v390 = vadd.f32 %v328, 1.0
  %v391 = vadd.f32 %v330, 1.0
  %v392 = vadd.f32 %v332, 1.0
  %v393 = vadd.f32 %v334, 1.0
  %v394 = vadd.f32 %v336, 1.0
  %v395 = vadd.f32 %v338, 1.0
  %v396 = vadd.f32 %v340, 1.0
  %v397 = vadd.f32 %v342, 1.0
  %v398 = vadd.f32 %v344, 1.0
  %v399 = vadd.f32 %v346, 1.0
  %v400 = vadd.f32 %v348, 1.0
  %v401 = vadd.f32 %v350, 1.0
  %v402 = vadd.f32 %v352, 1.0
  %v403 = vadd.f32 %v354, 1.0
  %v404 = vadd.f32 %v356, 1.0
  %v405 = vadd.f32 %v358, 1.0
  %v406 = vadd.f32 %v360, 1.0
  %v407 = vadd.f32 %v362, 1.0
  %v408 = vadd.f32 %v364, 1.0
  %v409 = vadd.f32 %v366, 1.0
  %v410 = vadd.f32 %v368, 1.0
  %v411 = vadd.f32 %v370, 1.0
  %v412 = vadd.f32 %v372, 1.0
  %v413 = vadd.f32 %v374, 1.0
  %v414 = vadd.f32 %v376, 1.0
  %v415 = vadd.f32 %v378, 1.0
  %v416 = vadd.f32 %v380, 1.0
  %v417 = vadd.f32 %v382, 1.0
  %v418 = vadd.f32 %v384, 1.0
  %v419 = vadd.f32 %v386, 1.0
  %v420 = vadd.f32 %v388, 1.0
  %v421 = vrcp.pop %v389
  %v422 = vmul.f32 %v389, %v421
  %v423 = vsub.f32 1.0, %v422
  %v424 = vmul.f32 %v421, %v423
  %v425 = vadd.f32 %v421, %v424
  %vm426 = vweird.f32 %v389
  %vm427 = vweird.f32 %v421
  %vm428 = vmor %vm426, %vm427
  %v429 = vsel %vm428, %v421, %v425
  %v430 = vand.u32 2147483647, %v389
  %vm431 = vcmp.eq.f32.partialorder %v430, 8.507059e+37
  %v432 = vand.u32 %v389, 2147483648
  %v433 = vor.u32 1.1754944e-38, %v432
  %v434 = vsel %vm431, %v433, %v429
  %v435 = vmul.f32 1.0, %v434
  %v436 = vrcp.pop %v390
  %v437 = vmul.f32 %v390, %v436
  %v438 = vsub.f32 1.0, %v437
  %v439 = vmul.f32 %v436, %v438
  %v440 = vadd.f32 %v436, %v439
  %vm441 = vweird.f32 %v390
  %vm442 = vweird.f32 %v436
  %vm443 = vmor %vm441, %vm442
  %v444 = vsel %vm443, %v436, %v440
  %v445 = vand.u32 2147483647, %v390
  %vm446 = vcmp.eq.f32.partialorder %v445, 8.507059e+37
  %v447 = vand.u32 %v390, 2147483648
  %v448 = vor.u32 1.1754944e-38, %v447
  %v449 = vsel %vm446, %v448, %v444
  %v450 = vmul.f32 1.0, %v449
  %v451 = vrcp.pop %v391
  %v452 = vmul.f32 %v391, %v451
  %v453 = vsub.f32 1.0, %v452
  %v454 = vmul.f32 %v451, %v453
  %v455 = vadd.f32 %v451, %v454
  %vm456 = vweird.f32 %v391
  %vm457 = vweird.f32 %v451
  %vm458 = vmor %vm456, %vm457
  %v459 = vsel %vm458, %v451, %v455
  %v460 = vand.u32 2147483647, %v391
  %vm461 = vcmp.eq.f32.partialorder %v460, 8.507059e+37
  %v462 = vand.u32 %v391, 2147483648
  %v463 = vor.u32 1.1754944e-38, %v462
  %v464 = vsel %vm461, %v463, %v459
  %v465 = vmul.f32 1.0, %v464
  %v466 = vrcp.pop %v392
  %v467 = vmul.f32 %v392, %v466
  %v468 = vsub.f32 1.0, %v467
  %v469 = vmul.f32 %v466, %v468
  %v470 = vadd.f32 %v466, %v469
  %vm471 = vweird.f32 %v392
  %vm472 = vweird.f32 %v466
  %vm473 = vmor %vm471, %vm472
  %v474 = vsel %vm473, %v466, %v470
  %v475 = vand.u32 2147483647, %v392
  %vm476 = vcmp.eq.f32.partialorder %v475, 8.507059e+37
  %v477 = vand.u32 %v392, 2147483648
  %v478 = vor.u32 1.1754944e-38, %v477
  %v479 = vsel %vm476, %v478, %v474
  %v480 = vmul.f32 1.0, %v479
  %v481 = vrcp.pop %v393
  %v482 = vmul.f32 %v393, %v481
  %v483 = vsub.f32 1.0, %v482
  %v484 = vmul.f32 %v481, %v483
  %v485 = vadd.f32 %v481, %v484
  %vm486 = vweird.f32 %v393
  %vm487 = vweird.f32 %v481
  %vm488 = vmor %vm486, %vm487
  %v489 = vsel %vm488, %v481, %v485
  %v490 = vand.u32 2147483647, %v393
  %vm491 = vcmp.eq.f32.partialorder %v490, 8.507059e+37
  %v492 = vand.u32 %v393, 2147483648
  %v493 = vor.u32 1.1754944e-38, %v492
  %v494 = vsel %vm491, %v493, %v489
  %v495 = vmul.f32 1.0, %v494
  %v496 = vrcp.pop %v394
  %v497 = vmul.f32 %v394, %v496
  %v498 = vsub.f32 1.0, %v497
  %v499 = vmul.f32 %v496, %v498
  %v500 = vadd.f32 %v496, %v499
  %vm501 = vweird.f32 %v394
  %vm502 = vweird.f32 %v496
  %vm503 = vmor %vm501, %vm502
  %v504 = vsel %vm503, %v496, %v500
  %v505 = vand.u32 2147483647, %v394
  %vm506 = vcmp.eq.f32.partialorder %v505, 8.507059e+37
  %v507 = vand.u32 %v394, 2147483648
  %v508 = vor.u32 1.1754944e-38, %v507
  %v509 = vsel %vm506, %v508, %v504
  %v510 = vmul.f32 1.0, %v509
  %v511 = vrcp.pop %v395
  %v512 = vmul.f32 %v395, %v511
  %v513 = vsub.f32 1.0, %v512
  %v514 = vmul.f32 %v511, %v513
  %v515 = vadd.f32 %v511, %v514
  %vm516 = vweird.f32 %v395
  %vm517 = vweird.f32 %v511
  %vm518 = vmor %vm516, %vm517
  %v519 = vsel %vm518, %v511, %v515
  %v520 = vand.u32 2147483647, %v395
  %vm521 = vcmp.eq.f32.partialorder %v520, 8.507059e+37
  %v522 = vand.u32 %v395, 2147483648
  %v523 = vor.u32 1.1754944e-38, %v522
  %v524 = vsel %vm521, %v523, %v519
  %v525 = vmul.f32 1.0, %v524
  %v526 = vrcp.pop %v396
  %v527 = vmul.f32 %v396, %v526
  %v528 = vsub.f32 1.0, %v527
  %v529 = vmul.f32 %v526, %v528
  %v530 = vadd.f32 %v526, %v529
  %vm531 = vweird.f32 %v396
  %vm532 = vweird.f32 %v526
  %vm533 = vmor %vm531, %vm532
  %v534 = vsel %vm533, %v526, %v530
  %v535 = vand.u32 2147483647, %v396
  %vm536 = vcmp.eq.f32.partialorder %v535, 8.507059e+37
  %v537 = vand.u32 %v396, 2147483648
  %v538 = vor.u32 1.1754944e-38, %v537
  %v539 = vsel %vm536, %v538, %v534
  %v540 = vmul.f32 1.0, %v539
  %v541 = vrcp.pop %v397
  %v542 = vmul.f32 %v397, %v541
  %v543 = vsub.f32 1.0, %v542
  %v544 = vmul.f32 %v541, %v543
  %v545 = vadd.f32 %v541, %v544
  %vm546 = vweird.f32 %v397
  %vm547 = vweird.f32 %v541
  %vm548 = vmor %vm546, %vm547
  %v549 = vsel %vm548, %v541, %v545
  %v550 = vand.u32 2147483647, %v397
  %vm551 = vcmp.eq.f32.partialorder %v550, 8.507059e+37
  %v552 = vand.u32 %v397, 2147483648
  %v553 = vor.u32 1.1754944e-38, %v552
  %v554 = vsel %vm551, %v553, %v549
  %v555 = vmul.f32 1.0, %v554
  %v556 = vrcp.pop %v398
  %v557 = vmul.f32 %v398, %v556
  %v558 = vsub.f32 1.0, %v557
  %v559 = vmul.f32 %v556, %v558
  %v560 = vadd.f32 %v556, %v559
  %vm561 = vweird.f32 %v398
  %vm562 = vweird.f32 %v556
  %vm563 = vmor %vm561, %vm562
  %v564 = vsel %vm563, %v556, %v560
  %v565 = vand.u32 2147483647, %v398
  %vm566 = vcmp.eq.f32.partialorder %v565, 8.507059e+37
  %v567 = vand.u32 %v398, 2147483648
  %v568 = vor.u32 1.1754944e-38, %v567
  %v569 = vsel %vm566, %v568, %v564
  %v570 = vmul.f32 1.0, %v569
  %v571 = vrcp.pop %v399
  %v572 = vmul.f32 %v399, %v571
  %v573 = vsub.f32 1.0, %v572
  %v574 = vmul.f32 %v571, %v573
  %v575 = vadd.f32 %v571, %v574
  %vm576 = vweird.f32 %v399
  %vm577 = vweird.f32 %v571
  %vm578 = vmor %vm576, %vm577
  %v579 = vsel %vm578, %v571, %v575
  %v580 = vand.u32 2147483647, %v399
  %vm581 = vcmp.eq.f32.partialorder %v580, 8.507059e+37
  %v582 = vand.u32 %v399, 2147483648
  %v583 = vor.u32 1.1754944e-38, %v582
  %v584 = vsel %vm581, %v583, %v579
  %v585 = vmul.f32 1.0, %v584
  %v586 = vrcp.pop %v400
  %v587 = vmul.f32 %v400, %v586
  %v588 = vsub.f32 1.0, %v587
  %v589 = vmul.f32 %v586, %v588
  %v590 = vadd.f32 %v586, %v589
  %vm591 = vweird.f32 %v400
  %vm592 = vweird.f32 %v586
  %vm593 = vmor %vm591, %vm592
  %v594 = vsel %vm593, %v586, %v590
  %v595 = vand.u32 2147483647, %v400
  %vm596 = vcmp.eq.f32.partialorder %v595, 8.507059e+37
  %v597 = vand.u32 %v400, 2147483648
  %v598 = vor.u32 1.1754944e-38, %v597
  %v599 = vsel %vm596, %v598, %v594
  %v600 = vmul.f32 1.0, %v599
  %v601 = vrcp.pop %v401
  %v602 = vmul.f32 %v401, %v601
  %v603 = vsub.f32 1.0, %v602
  %v604 = vmul.f32 %v601, %v603
  %v605 = vadd.f32 %v601, %v604
  %vm606 = vweird.f32 %v401
  %vm607 = vweird.f32 %v601
  %vm608 = vmor %vm606, %vm607
  %v609 = vsel %vm608, %v601, %v605
  %v610 = vand.u32 2147483647, %v401
  %vm611 = vcmp.eq.f32.partialorder %v610, 8.507059e+37
  %v612 = vand.u32 %v401, 2147483648
  %v613 = vor.u32 1.1754944e-38, %v612
  %v614 = vsel %vm611, %v613, %v609
  %v615 = vmul.f32 1.0, %v614
  %v616 = vrcp.pop %v402
  %v617 = vmul.f32 %v402, %v616
  %v618 = vsub.f32 1.0, %v617
  %v619 = vmul.f32 %v616, %v618
  %v620 = vadd.f32 %v616, %v619
  %vm621 = vweird.f32 %v402
  %vm622 = vweird.f32 %v616
  %vm623 = vmor %vm621, %vm622
  %v624 = vsel %vm623, %v616, %v620
  %v625 = vand.u32 2147483647, %v402
  %vm626 = vcmp.eq.f32.partialorder %v625, 8.507059e+37
  %v627 = vand.u32 %v402, 2147483648
  %v628 = vor.u32 1.1754944e-38, %v627
  %v629 = vsel %vm626, %v628, %v624
  %v630 = vmul.f32 1.0, %v629
  %v631 = vrcp.pop %v403
  %v632 = vmul.f32 %v403, %v631
  %v633 = vsub.f32 1.0, %v632
  %v634 = vmul.f32 %v631, %v633
  %v635 = vadd.f32 %v631, %v634
  %vm636 = vweird.f32 %v403
  %vm637 = vweird.f32 %v631
  %vm638 = vmor %vm636, %vm637
  %v639 = vsel %vm638, %v631, %v635
  %v640 = vand.u32 2147483647, %v403
  %vm641 = vcmp.eq.f32.partialorder %v640, 8.507059e+37
  %v642 = vand.u32 %v403, 2147483648
  %v643 = vor.u32 1.1754944e-38, %v642
  %v644 = vsel %vm641, %v643, %v639
  %v645 = vmul.f32 1.0, %v644
  %v646 = vrcp.pop %v404
  %v647 = vmul.f32 %v404, %v646
  %v648 = vsub.f32 1.0, %v647
  %v649 = vmul.f32 %v646, %v648
  %v650 = vadd.f32 %v646, %v649
  %vm651 = vweird.f32 %v404
  %vm652 = vweird.f32 %v646
  %vm653 = vmor %vm651, %vm652
  %v654 = vsel %vm653, %v646, %v650
  %v655 = vand.u32 2147483647, %v404
  %vm656 = vcmp.eq.f32.partialorder %v655, 8.507059e+37
  %v657 = vand.u32 %v404, 2147483648
  %v658 = vor.u32 1.1754944e-38, %v657
  %v659 = vsel %vm656, %v658, %v654
  %v660 = vmul.f32 1.0, %v659
  %v661 = vrcp.pop %v405
  %v662 = vmul.f32 %v405, %v661
  %v663 = vsub.f32 1.0, %v662
  %v664 = vmul.f32 %v661, %v663
  %v665 = vadd.f32 %v661, %v664
  %vm666 = vweird.f32 %v405
  %vm667 = vweird.f32 %v661
  %vm668 = vmor %vm666, %vm667
  %v669 = vsel %vm668, %v661, %v665
  %v670 = vand.u32 2147483647, %v405
  %vm671 = vcmp.eq.f32.partialorder %v670, 8.507059e+37
  %v672 = vand.u32 %v405, 2147483648
  %v673 = vor.u32 1.1754944e-38, %v672
  %v674 = vsel %vm671, %v673, %v669
  %v675 = vmul.f32 1.0, %v674
  %v676 = vrcp.pop %v406
  %v677 = vmul.f32 %v406, %v676
  %v678 = vsub.f32 1.0, %v677
  %v679 = vmul.f32 %v676, %v678
  %v680 = vadd.f32 %v676, %v679
  %vm681 = vweird.f32 %v406
  %vm682 = vweird.f32 %v676
  %vm683 = vmor %vm681, %vm682
  %v684 = vsel %vm683, %v676, %v680
  %v685 = vand.u32 2147483647, %v406
  %vm686 = vcmp.eq.f32.partialorder %v685, 8.507059e+37
  %v687 = vand.u32 %v406, 2147483648
  %v688 = vor.u32 1.1754944e-38, %v687
  %v689 = vsel %vm686, %v688, %v684
  %v690 = vmul.f32 1.0, %v689
  %v691 = vrcp.pop %v407
  %v692 = vmul.f32 %v407, %v691
  %v693 = vsub.f32 1.0, %v692
  %v694 = vmul.f32 %v691, %v693
  %v695 = vadd.f32 %v691, %v694
  %vm696 = vweird.f32 %v407
  %vm697 = vweird.f32 %v691
  %vm698 = vmor %vm696, %vm697
  %v699 = vsel %vm698, %v691, %v695
  %v700 = vand.u32 2147483647, %v407
  %vm701 = vcmp.eq.f32.partialorder %v700, 8.507059e+37
  %v702 = vand.u32 %v407, 2147483648
  %v703 = vor.u32 1.1754944e-38, %v702
  %v704 = vsel %vm701, %v703, %v699
  %v705 = vmul.f32 1.0, %v704
  %v706 = vrcp.pop %v408
  %v707 = vmul.f32 %v408, %v706
  %v708 = vsub.f32 1.0, %v707
  %v709 = vmul.f32 %v706, %v708
  %v710 = vadd.f32 %v706, %v709
  %vm711 = vweird.f32 %v408
  %vm712 = vweird.f32 %v706
  %vm713 = vmor %vm711, %vm712
  %v714 = vsel %vm713, %v706, %v710
  %v715 = vand.u32 2147483647, %v408
  %vm716 = vcmp.eq.f32.partialorder %v715, 8.507059e+37
  %v717 = vand.u32 %v408, 2147483648
  %v718 = vor.u32 1.1754944e-38, %v717
  %v719 = vsel %vm716, %v718, %v714
  %v720 = vmul.f32 1.0, %v719
  %v721 = vrcp.pop %v409
  %v722 = vmul.f32 %v409, %v721
  %v723 = vsub.f32 1.0, %v722
  %v724 = vmul.f32 %v721, %v723
  %v725 = vadd.f32 %v721, %v724
  %vm726 = vweird.f32 %v409
  %vm727 = vweird.f32 %v721
  %vm728 = vmor %vm726, %vm727
  %v729 = vsel %vm728, %v721, %v725
  %v730 = vand.u32 2147483647, %v409
  %vm731 = vcmp.eq.f32.partialorder %v730, 8.507059e+37
  %v732 = vand.u32 %v409, 2147483648
  %v733 = vor.u32 1.1754944e-38, %v732
  %v734 = vsel %vm731, %v733, %v729
  %v735 = vmul.f32 1.0, %v734
  %v736 = vrcp.pop %v410
  %v737 = vmul.f32 %v410, %v736
  %v738 = vsub.f32 1.0, %v737
  %v739 = vmul.f32 %v736, %v738
  %v740 = vadd.f32 %v736, %v739
  %vm741 = vweird.f32 %v410
  %vm742 = vweird.f32 %v736
  %vm743 = vmor %vm741, %vm742
  %v744 = vsel %vm743, %v736, %v740
  %v745 = vand.u32 2147483647, %v410
  %vm746 = vcmp.eq.f32.partialorder %v745, 8.507059e+37
  %v747 = vand.u32 %v410, 2147483648
  %v748 = vor.u32 1.1754944e-38, %v747
  %v749 = vsel %vm746, %v748, %v744
  %v750 = vmul.f32 1.0, %v749
  %v751 = vrcp.pop %v411
  %v752 = vmul.f32 %v411, %v751
  %v753 = vsub.f32 1.0, %v752
  %v754 = vmul.f32 %v751, %v753
  %v755 = vadd.f32 %v751, %v754
  %vm756 = vweird.f32 %v411
  %vm757 = vweird.f32 %v751
  %vm758 = vmor %vm756, %vm757
  %v759 = vsel %vm758, %v751, %v755
  %v760 = vand.u32 2147483647, %v411
  %vm761 = vcmp.eq.f32.partialorder %v760, 8.507059e+37
  %v762 = vand.u32 %v411, 2147483648
  %v763 = vor.u32 1.1754944e-38, %v762
  %v764 = vsel %vm761, %v763, %v759
  %v765 = vmul.f32 1.0, %v764
  %v766 = vrcp.pop %v412
  %v767 = vmul.f32 %v412, %v766
  %v768 = vsub.f32 1.0, %v767
  %v769 = vmul.f32 %v766, %v768
  %v770 = vadd.f32 %v766, %v769
  %vm771 = vweird.f32 %v412
  %vm772 = vweird.f32 %v766
  %vm773 = vmor %vm771, %vm772
  %v774 = vsel %vm773, %v766, %v770
  %v775 = vand.u32 2147483647, %v412
  %vm776 = vcmp.eq.f32.partialorder %v775, 8.507059e+37
  %v777 = vand.u32 %v412, 2147483648
  %v778 = vor.u32 1.1754944e-38, %v777
  %v779 = vsel %vm776, %v778, %v774
  %v780 = vmul.f32 1.0, %v779
  %v781 = vrcp.pop %v413
  %v782 = vmul.f32 %v413, %v781
  %v783 = vsub.f32 1.0, %v782
  %v784 = vmul.f32 %v781, %v783
  %v785 = vadd.f32 %v781, %v784
  %vm786 = vweird.f32 %v413
  %vm787 = vweird.f32 %v781
  %vm788 = vmor %vm786, %vm787
  %v789 = vsel %vm788, %v781, %v785
  %v790 = vand.u32 2147483647, %v413
  %vm791 = vcmp.eq.f32.partialorder %v790, 8.507059e+37
  %v792 = vand.u32 %v413, 2147483648
  %v793 = vor.u32 1.1754944e-38, %v792
  %v794 = vsel %vm791, %v793, %v789
  %v795 = vmul.f32 1.0, %v794
  %v796 = vrcp.pop %v414
  %v797 = vmul.f32 %v414, %v796
  %v798 = vsub.f32 1.0, %v797
  %v799 = vmul.f32 %v796, %v798
  %v800 = vadd.f32 %v796, %v799
  %vm801 = vweird.f32 %v414
  %vm802 = vweird.f32 %v796
  %vm803 = vmor %vm801, %vm802
  %v804 = vsel %vm803, %v796, %v800
  %v805 = vand.u32 2147483647, %v414
  %vm806 = vcmp.eq.f32.partialorder %v805, 8.507059e+37
  %v807 = vand.u32 %v414, 2147483648
  %v808 = vor.u32 1.1754944e-38, %v807
  %v809 = vsel %vm806, %v808, %v804
  %v810 = vmul.f32 1.0, %v809
  %v811 = vrcp.pop %v415
  %v812 = vmul.f32 %v415, %v811
  %v813 = vsub.f32 1.0, %v812
  %v814 = vmul.f32 %v811, %v813
  %v815 = vadd.f32 %v811, %v814
  %vm816 = vweird.f32 %v415
  %vm817 = vweird.f32 %v811
  %vm818 = vmor %vm816, %vm817
  %v819 = vsel %vm818, %v811, %v815
  %v820 = vand.u32 2147483647, %v415
  %vm821 = vcmp.eq.f32.partialorder %v820, 8.507059e+37
  %v822 = vand.u32 %v415, 2147483648
  %v823 = vor.u32 1.1754944e-38, %v822
  %v824 = vsel %vm821, %v823, %v819
  %v825 = vmul.f32 1.0, %v824
  %v826 = vrcp.pop %v416
  %v827 = vmul.f32 %v416, %v826
  %v828 = vsub.f32 1.0, %v827
  %v829 = vmul.f32 %v826, %v828
  %v830 = vadd.f32 %v826, %v829
  %vm831 = vweird.f32 %v416
  %vm832 = vweird.f32 %v826
  %vm833 = vmor %vm831, %vm832
  %v834 = vsel %vm833, %v826, %v830
  %v835 = vand.u32 2147483647, %v416
  %vm836 = vcmp.eq.f32.partialorder %v835, 8.507059e+37
  %v837 = vand.u32 %v416, 2147483648
  %v838 = vor.u32 1.1754944e-38, %v837
  %v839 = vsel %vm836, %v838, %v834
  %v840 = vmul.f32 1.0, %v839
  %v841 = vrcp.pop %v417
  %v842 = vmul.f32 %v417, %v841
  %v843 = vsub.f32 1.0, %v842
  %v844 = vmul.f32 %v841, %v843
  %v845 = vadd.f32 %v841, %v844
  %vm846 = vweird.f32 %v417
  %vm847 = vweird.f32 %v841
  %vm848 = vmor %vm846, %vm847
  %v849 = vsel %vm848, %v841, %v845
  %v850 = vand.u32 2147483647, %v417
  %vm851 = vcmp.eq.f32.partialorder %v850, 8.507059e+37
  %v852 = vand.u32 %v417, 2147483648
  %v853 = vor.u32 1.1754944e-38, %v852
  %v854 = vsel %vm851, %v853, %v849
  %v855 = vmul.f32 1.0, %v854
  %v856 = vrcp.pop %v418
  %v857 = vmul.f32 %v418, %v856
  %v858 = vsub.f32 1.0, %v857
  %v859 = vmul.f32 %v856, %v858
  %v860 = vadd.f32 %v856, %v859
  %vm861 = vweird.f32 %v418
  %vm862 = vweird.f32 %v856
  %vm863 = vmor %vm861, %vm862
  %v864 = vsel %vm863, %v856, %v860
  %v865 = vand.u32 2147483647, %v418
  %vm866 = vcmp.eq.f32.partialorder %v865, 8.507059e+37
  %v867 = vand.u32 %v418, 2147483648
  %v868 = vor.u32 1.1754944e-38, %v867
  %v869 = vsel %vm866, %v868, %v864
  %v870 = vmul.f32 1.0, %v869
  %v871 = vrcp.pop %v419
  %v872 = vmul.f32 %v419, %v871
  %v873 = vsub.f32 1.0, %v872
  %v874 = vmul.f32 %v871, %v873
  %v875 = vadd.f32 %v871, %v874
  %vm876 = vweird.f32 %v419
  %vm877 = vweird.f32 %v871
  %vm878 = vmor %vm876, %vm877
  %v879 = vsel %vm878, %v871, %v875
  %v880 = vand.u32 2147483647, %v419
  %vm881 = vcmp.eq.f32.partialorder %v880, 8.507059e+37
  %v882 = vand.u32 %v419, 2147483648
  %v883 = vor.u32 1.1754944e-38, %v882
  %v884 = vsel %vm881, %v883, %v879
  %v885 = vmul.f32 1.0, %v884
  %v886 = vrcp.pop %v420
  %v887 = vmul.f32 %v420, %v886
  %v888 = vsub.f32 1.0, %v887
  %v889 = vmul.f32 %v886, %v888
  %v890 = vadd.f32 %v886, %v889
  %vm891 = vweird.f32 %v420
  %vm892 = vweird.f32 %v886
  %vm893 = vmor %vm891, %vm892
  %v894 = vsel %vm893, %v886, %v890
  %v895 = vand.u32 2147483647, %v420
  %vm896 = vcmp.eq.f32.partialorder %v895, 8.507059e+37
  %v897 = vand.u32 %v420, 2147483648
  %v898 = vor.u32 1.1754944e-38, %v897
  %v899 = vsel %vm896, %v898, %v894
  %v900 = vmul.f32 1.0, %v899
  %v901 = vmul.f32 %v214, %v435
  %v902 = vmul.f32 %v216, %v450
  %v903 = vmul.f32 %v219, %v465
  %v904 = vmul.f32 %v221, %v480
  %v905 = vmul.f32 %v224, %v495
  %v906 = vmul.f32 %v226, %v510
  %v907 = vmul.f32 %v229, %v525
  %v908 = vmul.f32 %v231, %v540
  %v909 = vmul.f32 %v234, %v555
  %v910 = vmul.f32 %v236, %v570
  %v911 = vmul.f32 %v239, %v585
  %v912 = vmul.f32 %v241, %v600
  %v913 = vmul.f32 %v244, %v615
  %v914 = vmul.f32 %v246, %v630
  %v915 = vmul.f32 %v249, %v645
  %v916 = vmul.f32 %v251, %v660
  %v917 = vmul.f32 %v254, %v675
  %v918 = vmul.f32 %v256, %v690
  %v919 = vmul.f32 %v259, %v705
  %v920 = vmul.f32 %v261, %v720
  %v921 = vmul.f32 %v264, %v735
  %v922 = vmul.f32 %v266, %v750
  %v923 = vmul.f32 %v269, %v765
  %v924 = vmul.f32 %v271, %v780
  %v925 = vmul.f32 %v274, %v795
  %v926 = vmul.f32 %v276, %v810
  %v927 = vmul.f32 %v279, %v825
  %v928 = vmul.f32 %v281, %v840
  %v929 = vmul.f32 %v284, %v855
  %v930 = vmul.f32 %v286, %v870
  %v931 = vmul.f32 %v289, %v885
  %v932 = vmul.f32 %v291, %v900
  %v933 = vpack.c.bf16 %v901, %v901
  %v934 = vpack.c.bf16 %v902, %v902
  %v935 = vpack.c.bf16 %v903, %v903
  %v936 = vpack.c.bf16 %v904, %v904
  %v937 = vpack.c.bf16 %v905, %v905
  %v938 = vpack.c.bf16 %v906, %v906
  %v939 = vpack.c.bf16 %v907, %v907
  %v940 = vpack.c.bf16 %v908, %v908
  %v941 = vpack.c.bf16 %v909, %v909
  %v942 = vpack.c.bf16 %v910, %v910
  %v943 = vpack.c.bf16 %v911, %v911
  %v944 = vpack.c.bf16 %v912, %v912
  %v945 = vpack.c.bf16 %v913, %v913
  %v946 = vpack.c.bf16 %v914, %v914
  %v947 = vpack.c.bf16 %v915, %v915
  %v948 = vpack.c.bf16 %v916, %v916
  %v949 = vpack.c.bf16 %v917, %v917
  %v950 = vpack.c.bf16 %v918, %v918
  %v951 = vpack.c.bf16 %v919, %v919
  %v952 = vpack.c.bf16 %v920, %v920
  %v953 = vpack.c.bf16 %v921, %v921
  %v954 = vpack.c.bf16 %v922, %v922
  %v955 = vpack.c.bf16 %v923, %v923
  %v956 = vpack.c.bf16 %v924, %v924
  %v957 = vpack.c.bf16 %v925, %v925
  %v958 = vpack.c.bf16 %v926, %v926
  %v959 = vpack.c.bf16 %v927, %v927
  %v960 = vpack.c.bf16 %v928, %v928
  %v961 = vpack.c.bf16 %v929, %v929
  %v962 = vpack.c.bf16 %v930, %v930
  %v963 = vpack.c.bf16 %v931, %v931
  %v964 = vpack.c.bf16 %v932, %v932
  %vm965 = vcmask 125952
  %966 = vst.msk [vmem:[%s3] sm:$0xf] %vm965, %v933
  %967 = vst.msk [vmem:[%s3 + $0x4] sm:$0xf] %vm965, %v934
  %968 = vst.msk [vmem:[%s3 + $0x8] sm:$0xf] %vm965, %v935
  %969 = vst.msk [vmem:[%s3 + $0xc] sm:$0xf] %vm965, %v936
  %970 = vst.msk [vmem:[%s3 + $0x10] sm:$0xf] %vm965, %v937
  %971 = vst.msk [vmem:[%s3 + $0x14] sm:$0xf] %vm965, %v938
  %972 = vst.msk [vmem:[%s3 + $0x18] sm:$0xf] %vm965, %v939
  %973 = vst.msk [vmem:[%s3 + $0x1c] sm:$0xf] %vm965, %v940
  %974 = vst.msk [vmem:[%s3 + $0x20] sm:$0xf] %vm965, %v941
  %975 = vst.msk [vmem:[%s3 + $0x24] sm:$0xf] %vm965, %v942
  %976 = vst.msk [vmem:[%s3 + $0x28] sm:$0xf] %vm965, %v943
  %977 = vst.msk [vmem:[%s3 + $0x2c] sm:$0xf] %vm965, %v944
  %978 = vst.msk [vmem:[%s3 + $0x30] sm:$0xf] %vm965, %v945
  %979 = vst.msk [vmem:[%s3 + $0x34] sm:$0xf] %vm965, %v946
  %980 = vst.msk [vmem:[%s3 + $0x38] sm:$0xf] %vm965, %v947
  %981 = vst.msk [vmem:[%s3 + $0x3c] sm:$0xf] %vm965, %v948
  %982 = vst.msk [vmem:[%s3 + $0x40] sm:$0xf] %vm965, %v949
  %983 = vst.msk [vmem:[%s3 + $0x44] sm:$0xf] %vm965, %v950
  %984 = vst.msk [vmem:[%s3 + $0x48] sm:$0xf] %vm965, %v951
  %985 = vst.msk [vmem:[%s3 + $0x4c] sm:$0xf] %vm965, %v952
  %986 = vst.msk [vmem:[%s3 + $0x50] sm:$0xf] %vm965, %v953
  %987 = vst.msk [vmem:[%s3 + $0x54] sm:$0xf] %vm965, %v954
  %988 = vst.msk [vmem:[%s3 + $0x58] sm:$0xf] %vm965, %v955
  %989 = vst.msk [vmem:[%s3 + $0x5c] sm:$0xf] %vm965, %v956
  %990 = vst.msk [vmem:[%s3 + $0x60] sm:$0xf] %vm965, %v957
  %991 = vst.msk [vmem:[%s3 + $0x64] sm:$0xf] %vm965, %v958
  %992 = vst.msk [vmem:[%s3 + $0x68] sm:$0xf] %vm965, %v959
  %993 = vst.msk [vmem:[%s3 + $0x6c] sm:$0xf] %vm965, %v960
  %994 = vst.msk [vmem:[%s3 + $0x70] sm:$0xf] %vm965, %v961
  %995 = vst.msk [vmem:[%s3 + $0x74] sm:$0xf] %vm965, %v962
  %996 = vst.msk [vmem:[%s3 + $0x78] sm:$0xf] %vm965, %v963
  %997 = vst.msk [vmem:[%s3 + $0x7c] sm:$0xf] %vm965, %v964
  // Predicated region
  $region14: #{pose_conditioning_embedding_pallas.4} parent=0 // pred_check
    _
  $region15: #{pose_conditioning_embedding_pallas.4} parent=0 // pred_check_branch
    %999 = sbr.rel (0) target = $region17
  $region16: #{pose_conditioning_embedding_pallas.4} parent=0 // pred_region
    _
  $region17: #{pose_conditioning_embedding_pallas.4} parent=0 // pred_fallthru
    _
  // Predicated region
  $region18: #{pose_conditioning_embedding_pallas.4} parent=0 // pred_check
    _
  $region19: #{pose_conditioning_embedding_pallas.4} parent=0 // pred_check_branch
    %1001 = sbr.rel (0) target = $region21
  $region20: #{pose_conditioning_embedding_pallas.4} parent=0 // pred_region
    _
  $region21: #{pose_conditioning_embedding_pallas.4} parent=0 // pred_fallthru
    _

// kernel: pose_conditioning_embedding_pallas.5
$region0: #{pose_conditioning_embedding_pallas.5}
  #allocation0 [shape = 'u32[]', space=smem, size = 0x4, offset = 0x4, fixed_abs, tag = 'smem constant byte address 0x4 - core index']
  #allocation1 [shape = 'u32[72,128]{1,0:T(1,128)}', space=vmem, size = 0x9000, scoped, tag = 'internal scratch']
  %s0 = inlined_call_operand.vmem [shape: bf16[64,256], index: 0, kind: input, shape index: {}]
  %s1 = inlined_call_operand.vmem [shape: bf16[256,32], index: 1, kind: input, shape index: {}]
  %s2 = inlined_call_operand.vmem [shape: f32[1,32], index: 2, kind: input, shape index: {}]
  %s3 = inlined_call_operand.vmem [shape: bf16[64,32], index: 3, kind: output, shape index: {}]
  %s4 = sld [smem:[#allocation0]]
  $region22: #{pose_conditioning_embedding_pallas.5} parent=0
    _
  %s6 = ssub.s32 1, %s4
  %s7 = scalar_select 0, %s6, %s4
  // Predicated region
  $region2: #{pose_conditioning_embedding_pallas.5} parent=0 // pred_check
    _
  $region3: #{pose_conditioning_embedding_pallas.5} parent=0 // pred_check_branch
    %9 = sbr.rel (0) target = $region5
  $region4: #{pose_conditioning_embedding_pallas.5} parent=0 // pred_region
    _
  $region5: #{pose_conditioning_embedding_pallas.5} parent=0 // pred_fallthru
    _
  // Predicated region
  $region6: #{pose_conditioning_embedding_pallas.5} parent=0 // pred_check
    _
  $region7: #{pose_conditioning_embedding_pallas.5} parent=0 // pred_check_branch
    %11 = sbr.rel (0) target = $region9
  $region8: #{pose_conditioning_embedding_pallas.5} parent=0 // pred_region
    _
  $region9: #{pose_conditioning_embedding_pallas.5} parent=0 // pred_fallthru
    _
  // Predicated region
  $region10: #{pose_conditioning_embedding_pallas.5} parent=0 // pred_check
    _
  $region11: #{pose_conditioning_embedding_pallas.5} parent=0 // pred_check_branch
    %13 = sbr.rel (0) target = $region13
  $region12: #{pose_conditioning_embedding_pallas.5} parent=0 // pred_region
    _
  $region13: #{pose_conditioning_embedding_pallas.5} parent=0 // pred_fallthru
    _
  %v14 = vld [vmem:[%s0] sm:$0xff]
  %v15 = vld [vmem:[%s0 + $0x8] sm:$0xff]
  %v16 = vld [vmem:[%s0 + $0x10] sm:$0xff]
  %v17 = vld [vmem:[%s0 + $0x18] sm:$0xff]
  %v18 = vld [vmem:[%s0 + $0x20] sm:$0xff]
  %v19 = vld [vmem:[%s0 + $0x28] sm:$0xff]
  %v20 = vld [vmem:[%s0 + $0x30] sm:$0xff]
  %v21 = vld [vmem:[%s0 + $0x38] sm:$0xff]
  %v22 = vld [vmem:[%s1] sm:$0xf]
  %v23 = vld [vmem:[%s1 + $0x4] sm:$0xf]
  %v24 = vld [vmem:[%s1 + $0x8] sm:$0xf]
  %v25 = vld [vmem:[%s1 + $0xc] sm:$0xf]
  %v26 = vld [vmem:[%s1 + $0x10] sm:$0xf]
  %v27 = vld [vmem:[%s1 + $0x14] sm:$0xf]
  %v28 = vld [vmem:[%s1 + $0x18] sm:$0xf]
  %v29 = vld [vmem:[%s1 + $0x1c] sm:$0xf]
  %v30 = vld [vmem:[%s1 + $0x20] sm:$0xf]
  %v31 = vld [vmem:[%s1 + $0x24] sm:$0xf]
  %v32 = vld [vmem:[%s1 + $0x28] sm:$0xf]
  %v33 = vld [vmem:[%s1 + $0x2c] sm:$0xf]
  %v34 = vld [vmem:[%s1 + $0x30] sm:$0xf]
  %v35 = vld [vmem:[%s1 + $0x34] sm:$0xf]
  %v36 = vld [vmem:[%s1 + $0x38] sm:$0xf]
  %v37 = vld [vmem:[%s1 + $0x3c] sm:$0xf]
  %v38 = vld [vmem:[%s1 + $0x40] sm:$0xf]
  %v39 = vld [vmem:[%s1 + $0x44] sm:$0xf]
  %v40 = vld [vmem:[%s1 + $0x48] sm:$0xf]
  %v41 = vld [vmem:[%s1 + $0x4c] sm:$0xf]
  %v42 = vld [vmem:[%s1 + $0x50] sm:$0xf]
  %v43 = vld [vmem:[%s1 + $0x54] sm:$0xf]
  %v44 = vld [vmem:[%s1 + $0x58] sm:$0xf]
  %v45 = vld [vmem:[%s1 + $0x5c] sm:$0xf]
  %v46 = vld [vmem:[%s1 + $0x60] sm:$0xf]
  %v47 = vld [vmem:[%s1 + $0x64] sm:$0xf]
  %v48 = vld [vmem:[%s1 + $0x68] sm:$0xf]
  %v49 = vld [vmem:[%s1 + $0x6c] sm:$0xf]
  %v50 = vld [vmem:[%s1 + $0x70] sm:$0xf]
  %v51 = vld [vmem:[%s1 + $0x74] sm:$0xf]
  %v52 = vld [vmem:[%s1 + $0x78] sm:$0xf]
  %v53 = vld [vmem:[%s1 + $0x7c] sm:$0xf]
  %v54 = vld [vmem:[%s2] sm:$0x1]
  %v56 = vperm.slane %v54, 0
  %v66 = vunpack.c.l.b16 %v14
  %v67 = vunpack.c.h.b16 %v14
  %v68 = vunpack.c.l.b16 %v15
  %v69 = vunpack.c.h.b16 %v15
  %v70 = vunpack.c.l.b16 %v16
  %v71 = vunpack.c.h.b16 %v16
  %v72 = vunpack.c.l.b16 %v17
  %v73 = vunpack.c.h.b16 %v17
  %v74 = vunpack.c.l.b16 %v18
  %v75 = vunpack.c.h.b16 %v18
  %v76 = vunpack.c.l.b16 %v19
  %v77 = vunpack.c.h.b16 %v19
  %v78 = vunpack.c.l.b16 %v20
  %v79 = vunpack.c.h.b16 %v20
  %v80 = vunpack.c.l.b16 %v21
  %v81 = vunpack.c.h.b16 %v21
  %v82 = vpack.c.b16 %v68, %v66
  %v83 = vpack.c.b16 %v69, %v67
  %v84 = vpack.c.b16 %v72, %v70
  %v85 = vpack.c.b16 %v73, %v71
  %v86 = vpack.c.b16 %v76, %v74
  %v87 = vpack.c.b16 %v77, %v75
  %v88 = vpack.c.b16 %v80, %v78
  %v89 = vpack.c.b16 %v81, %v79
  %v130 = vunpack.c.l.b16 %v22
  %v131 = vunpack.c.l.b16 %v23
  %v132 = vunpack.c.l.b16 %v24
  %v133 = vunpack.c.l.b16 %v25
  %v134 = vunpack.c.l.b16 %v26
  %v135 = vunpack.c.l.b16 %v27
  %v136 = vunpack.c.l.b16 %v28
  %v137 = vunpack.c.l.b16 %v29
  %v138 = vunpack.c.l.b16 %v30
  %v139 = vunpack.c.l.b16 %v31
  %v140 = vunpack.c.l.b16 %v32
  %v141 = vunpack.c.l.b16 %v33
  %v142 = vunpack.c.l.b16 %v34
  %v143 = vunpack.c.l.b16 %v35
  %v144 = vunpack.c.l.b16 %v36
  %v145 = vunpack.c.l.b16 %v37
  %v146 = vunpack.c.l.b16 %v38
  %v147 = vunpack.c.l.b16 %v39
  %v148 = vunpack.c.l.b16 %v40
  %v149 = vunpack.c.l.b16 %v41
  %v150 = vunpack.c.l.b16 %v42
  %v151 = vunpack.c.l.b16 %v43
  %v152 = vunpack.c.l.b16 %v44
  %v153 = vunpack.c.l.b16 %v45
  %v154 = vunpack.c.l.b16 %v46
  %v155 = vunpack.c.l.b16 %v47
  %v156 = vunpack.c.l.b16 %v48
  %v157 = vunpack.c.l.b16 %v49
  %v158 = vunpack.c.l.b16 %v50
  %v159 = vunpack.c.l.b16 %v51
  %v160 = vunpack.c.l.b16 %v52
  %v161 = vunpack.c.l.b16 %v53
  %v162 = vpack.c.b16 %v131, %v130
  %v163 = vpack.c.b16 %v133, %v132
  %v164 = vpack.c.b16 %v135, %v134
  %v165 = vpack.c.b16 %v137, %v136
  %v166 = vpack.c.b16 %v139, %v138
  %v167 = vpack.c.b16 %v141, %v140
  %v168 = vpack.c.b16 %v143, %v142
  %v169 = vpack.c.b16 %v145, %v144
  %v170 = vpack.c.b16 %v147, %v146
  %v171 = vpack.c.b16 %v149, %v148
  %v172 = vpack.c.b16 %v151, %v150
  %v173 = vpack.c.b16 %v153, %v152
  %v174 = vpack.c.b16 %v155, %v154
  %v175 = vpack.c.b16 %v157, %v156
  %v176 = vpack.c.b16 %v159, %v158
  %v177 = vpack.c.b16 %v161, %v160
  %194 = vmatpush.bf16.msra.mxu0 %v169
  %195 = vmatpush.bf16.msra.mxu0 %v168
  %196 = vmatpush.bf16.msra.mxu0 %v167
  %197 = vmatpush.bf16.msra.mxu0 %v166
  %198 = vmatpush.bf16.msra.mxu0 %v165
  %199 = vmatpush.bf16.msra.mxu0 %v164
  %200 = vmatpush.bf16.msra.mxu0 %v163
  %201 = vmatpush.bf16.msra.mxu0 %v162
  %202 = vmatmul.bf16.gmra.mxu0 %v82
  %v203 = vpop.f32.mrf.mxu0
  %v204 = vadd.f32 %v56, %v203
  %v205 = vpop.f32.mrf.mxu0
  %v206 = vadd.f32 %v56, %v205
  %207 = vmatmul.bf16.gmra.mxu0 %v84
  %v208 = vpop.f32.mrf.mxu0
  %v209 = vadd.f32 %v56, %v208
  %v210 = vpop.f32.mrf.mxu0
  %v211 = vadd.f32 %v56, %v210
  %212 = vmatmul.bf16.gmra.mxu0 %v86
  %v213 = vpop.f32.mrf.mxu0
  %v214 = vadd.f32 %v56, %v213
  %v215 = vpop.f32.mrf.mxu0
  %v216 = vadd.f32 %v56, %v215
  %217 = vmatmul.bf16.gmra.mxu0 %v88
  %v218 = vpop.f32.mrf.mxu0
  %v219 = vadd.f32 %v56, %v218
  %v220 = vpop.f32.mrf.mxu0
  %v221 = vadd.f32 %v56, %v220
  %222 = vdwg.mxu0
  %223 = vmatpush.bf16.msra.mxu0 %v177
  %224 = vmatpush.bf16.msra.mxu0 %v176
  %225 = vmatpush.bf16.msra.mxu0 %v175
  %226 = vmatpush.bf16.msra.mxu0 %v174
  %227 = vmatpush.bf16.msra.mxu0 %v173
  %228 = vmatpush.bf16.msra.mxu0 %v172
  %229 = vmatpush.bf16.msra.mxu0 %v171
  %230 = vmatpush.bf16.msra.mxu0 %v170
  %231 = vmatmul.bf16.gmra.mxu0 %v83
  %v232 = vpop.f32.mrf.mxu0
  %v233 = vadd.f32 %v204, %v232
  %v234 = vpop.f32.mrf.mxu0
  %v235 = vadd.f32 %v206, %v234
  %236 = vmatmul.bf16.gmra.mxu0 %v85
  %v237 = vpop.f32.mrf.mxu0
  %v238 = vadd.f32 %v209, %v237
  %v239 = vpop.f32.mrf.mxu0
  %v240 = vadd.f32 %v211, %v239
  %241 = vmatmul.bf16.gmra.mxu0 %v87
  %v242 = vpop.f32.mrf.mxu0
  %v243 = vadd.f32 %v214, %v242
  %v244 = vpop.f32.mrf.mxu0
  %v245 = vadd.f32 %v216, %v244
  %246 = vmatmul.bf16.gmra.mxu0 %v89
  %v247 = vpop.f32.mrf.mxu0
  %v248 = vadd.f32 %v219, %v247
  %v249 = vpop.f32.mrf.mxu0
  %v250 = vadd.f32 %v221, %v249
  %251 = vdwg.mxu0
  %v252 = vxor.u32 %v233, 2147483648
  %v253 = vxor.u32 %v235, 2147483648
  %v254 = vxor.u32 %v238, 2147483648
  %v255 = vxor.u32 %v240, 2147483648
  %v256 = vxor.u32 %v243, 2147483648
  %v257 = vxor.u32 %v245, 2147483648
  %v258 = vxor.u32 %v248, 2147483648
  %v259 = vxor.u32 %v250, 2147483648
  %v260 = vmul.f32 %v252, 1.442695
  %v261 = vpow.pop %v260
  %v262 = vmul.f32 %v253, 1.442695
  %v263 = vpow.pop %v262
  %v264 = vmul.f32 %v254, 1.442695
  %v265 = vpow.pop %v264
  %v266 = vmul.f32 %v255, 1.442695
  %v267 = vpow.pop %v266
  %v268 = vmul.f32 %v256, 1.442695
  %v269 = vpow.pop %v268
  %v270 = vmul.f32 %v257, 1.442695
  %v271 = vpow.pop %v270
  %v272 = vmul.f32 %v258, 1.442695
  %v273 = vpow.pop %v272
  %v274 = vmul.f32 %v259, 1.442695
  %v275 = vpow.pop %v274
  %v276 = vadd.f32 %v261, 1.0
  %v277 = vadd.f32 %v263, 1.0
  %v278 = vadd.f32 %v265, 1.0
  %v279 = vadd.f32 %v267, 1.0
  %v280 = vadd.f32 %v269, 1.0
  %v281 = vadd.f32 %v271, 1.0
  %v282 = vadd.f32 %v273, 1.0
  %v283 = vadd.f32 %v275, 1.0
  %v284 = vrcp.pop %v276
  %v285 = vmul.f32 %v276, %v284
  %v286 = vsub.f32 1.0, %v285
  %v287 = vmul.f32 %v284, %v286
  %v288 = vadd.f32 %v284, %v287
  %vm289 = vweird.f32 %v276
  %vm290 = vweird.f32 %v284
  %vm291 = vmor %vm289, %vm290
  %v292 = vsel %vm291, %v284, %v288
  %v293 = vand.u32 2147483647, %v276
  %vm294 = vcmp.eq.f32.partialorder %v293, 8.507059e+37
  %v295 = vand.u32 %v276, 2147483648
  %v296 = vor.u32 1.1754944e-38, %v295
  %v297 = vsel %vm294, %v296, %v292
  %v298 = vmul.f32 1.0, %v297
  %v299 = vrcp.pop %v277
  %v300 = vmul.f32 %v277, %v299
  %v301 = vsub.f32 1.0, %v300
  %v302 = vmul.f32 %v299, %v301
  %v303 = vadd.f32 %v299, %v302
  %vm304 = vweird.f32 %v277
  %vm305 = vweird.f32 %v299
  %vm306 = vmor %vm304, %vm305
  %v307 = vsel %vm306, %v299, %v303
  %v308 = vand.u32 2147483647, %v277
  %vm309 = vcmp.eq.f32.partialorder %v308, 8.507059e+37
  %v310 = vand.u32 %v277, 2147483648
  %v311 = vor.u32 1.1754944e-38, %v310
  %v312 = vsel %vm309, %v311, %v307
  %v313 = vmul.f32 1.0, %v312
  %v314 = vrcp.pop %v278
  %v315 = vmul.f32 %v278, %v314
  %v316 = vsub.f32 1.0, %v315
  %v317 = vmul.f32 %v314, %v316
  %v318 = vadd.f32 %v314, %v317
  %vm319 = vweird.f32 %v278
  %vm320 = vweird.f32 %v314
  %vm321 = vmor %vm319, %vm320
  %v322 = vsel %vm321, %v314, %v318
  %v323 = vand.u32 2147483647, %v278
  %vm324 = vcmp.eq.f32.partialorder %v323, 8.507059e+37
  %v325 = vand.u32 %v278, 2147483648
  %v326 = vor.u32 1.1754944e-38, %v325
  %v327 = vsel %vm324, %v326, %v322
  %v328 = vmul.f32 1.0, %v327
  %v329 = vrcp.pop %v279
  %v330 = vmul.f32 %v279, %v329
  %v331 = vsub.f32 1.0, %v330
  %v332 = vmul.f32 %v329, %v331
  %v333 = vadd.f32 %v329, %v332
  %vm334 = vweird.f32 %v279
  %vm335 = vweird.f32 %v329
  %vm336 = vmor %vm334, %vm335
  %v337 = vsel %vm336, %v329, %v333
  %v338 = vand.u32 2147483647, %v279
  %vm339 = vcmp.eq.f32.partialorder %v338, 8.507059e+37
  %v340 = vand.u32 %v279, 2147483648
  %v341 = vor.u32 1.1754944e-38, %v340
  %v342 = vsel %vm339, %v341, %v337
  %v343 = vmul.f32 1.0, %v342
  %v344 = vrcp.pop %v280
  %v345 = vmul.f32 %v280, %v344
  %v346 = vsub.f32 1.0, %v345
  %v347 = vmul.f32 %v344, %v346
  %v348 = vadd.f32 %v344, %v347
  %vm349 = vweird.f32 %v280
  %vm350 = vweird.f32 %v344
  %vm351 = vmor %vm349, %vm350
  %v352 = vsel %vm351, %v344, %v348
  %v353 = vand.u32 2147483647, %v280
  %vm354 = vcmp.eq.f32.partialorder %v353, 8.507059e+37
  %v355 = vand.u32 %v280, 2147483648
  %v356 = vor.u32 1.1754944e-38, %v355
  %v357 = vsel %vm354, %v356, %v352
  %v358 = vmul.f32 1.0, %v357
  %v359 = vrcp.pop %v281
  %v360 = vmul.f32 %v281, %v359
  %v361 = vsub.f32 1.0, %v360
  %v362 = vmul.f32 %v359, %v361
  %v363 = vadd.f32 %v359, %v362
  %vm364 = vweird.f32 %v281
  %vm365 = vweird.f32 %v359
  %vm366 = vmor %vm364, %vm365
  %v367 = vsel %vm366, %v359, %v363
  %v368 = vand.u32 2147483647, %v281
  %vm369 = vcmp.eq.f32.partialorder %v368, 8.507059e+37
  %v370 = vand.u32 %v281, 2147483648
  %v371 = vor.u32 1.1754944e-38, %v370
  %v372 = vsel %vm369, %v371, %v367
  %v373 = vmul.f32 1.0, %v372
  %v374 = vrcp.pop %v282
  %v375 = vmul.f32 %v282, %v374
  %v376 = vsub.f32 1.0, %v375
  %v377 = vmul.f32 %v374, %v376
  %v378 = vadd.f32 %v374, %v377
  %vm379 = vweird.f32 %v282
  %vm380 = vweird.f32 %v374
  %vm381 = vmor %vm379, %vm380
  %v382 = vsel %vm381, %v374, %v378
  %v383 = vand.u32 2147483647, %v282
  %vm384 = vcmp.eq.f32.partialorder %v383, 8.507059e+37
  %v385 = vand.u32 %v282, 2147483648
  %v386 = vor.u32 1.1754944e-38, %v385
  %v387 = vsel %vm384, %v386, %v382
  %v388 = vmul.f32 1.0, %v387
  %v389 = vrcp.pop %v283
  %v390 = vmul.f32 %v283, %v389
  %v391 = vsub.f32 1.0, %v390
  %v392 = vmul.f32 %v389, %v391
  %v393 = vadd.f32 %v389, %v392
  %vm394 = vweird.f32 %v283
  %vm395 = vweird.f32 %v389
  %vm396 = vmor %vm394, %vm395
  %v397 = vsel %vm396, %v389, %v393
  %v398 = vand.u32 2147483647, %v283
  %vm399 = vcmp.eq.f32.partialorder %v398, 8.507059e+37
  %v400 = vand.u32 %v283, 2147483648
  %v401 = vor.u32 1.1754944e-38, %v400
  %v402 = vsel %vm399, %v401, %v397
  %v403 = vmul.f32 1.0, %v402
  %v404 = vmul.f32 %v233, %v298
  %v405 = vmul.f32 %v235, %v313
  %v406 = vmul.f32 %v238, %v328
  %v407 = vmul.f32 %v240, %v343
  %v408 = vmul.f32 %v243, %v358
  %v409 = vmul.f32 %v245, %v373
  %v410 = vmul.f32 %v248, %v388
  %v411 = vmul.f32 %v250, %v403
  %v412 = vpack.c.bf16 %v404, %v404
  %v413 = vpack.c.bf16 %v405, %v405
  %v414 = vpack.c.bf16 %v406, %v406
  %v415 = vpack.c.bf16 %v407, %v407
  %v416 = vpack.c.bf16 %v408, %v408
  %v417 = vpack.c.bf16 %v409, %v409
  %v418 = vpack.c.bf16 %v410, %v410
  %v419 = vpack.c.bf16 %v411, %v411
  %vm420 = vcmask 257024
  %421 = vst.msk [vmem:[%s3] sm:$0xf] %vm420, %v412
  %422 = vst.msk [vmem:[%s3 + $0x4] sm:$0xf] %vm420, %v413
  %423 = vst.msk [vmem:[%s3 + $0x8] sm:$0xf] %vm420, %v414
  %424 = vst.msk [vmem:[%s3 + $0xc] sm:$0xf] %vm420, %v415
  %425 = vst.msk [vmem:[%s3 + $0x10] sm:$0xf] %vm420, %v416
  %426 = vst.msk [vmem:[%s3 + $0x14] sm:$0xf] %vm420, %v417
  %427 = vst.msk [vmem:[%s3 + $0x18] sm:$0xf] %vm420, %v418
  %428 = vst.msk [vmem:[%s3 + $0x1c] sm:$0xf] %vm420, %v419
  // Predicated region
  $region14: #{pose_conditioning_embedding_pallas.5} parent=0 // pred_check
    _
  $region15: #{pose_conditioning_embedding_pallas.5} parent=0 // pred_check_branch
    %430 = sbr.rel (0) target = $region17
  $region16: #{pose_conditioning_embedding_pallas.5} parent=0 // pred_region
    _
  $region17: #{pose_conditioning_embedding_pallas.5} parent=0 // pred_fallthru
    _
  // Predicated region
  $region18: #{pose_conditioning_embedding_pallas.5} parent=0 // pred_check
    _
  $region19: #{pose_conditioning_embedding_pallas.5} parent=0 // pred_check_branch
    %432 = sbr.rel (0) target = $region21
  $region20: #{pose_conditioning_embedding_pallas.5} parent=0 // pred_region
    _
  $region21: #{pose_conditioning_embedding_pallas.5} parent=0 // pred_fallthru
    _

// kernel: pose_conditioning_embedding_pallas.6
$region0: #{pose_conditioning_embedding_pallas.6}
  #allocation0 [shape = 'u32[]', space=smem, size = 0x4, offset = 0x4, fixed_abs, tag = 'smem constant byte address 0x4 - core index']
  #allocation1 [shape = 'u32[72,128]{1,0:T(1,128)}', space=vmem, size = 0x9000, scoped, tag = 'internal scratch']
  %s0 = inlined_call_operand.vmem [shape: bf16[16,512], index: 0, kind: input, shape index: {}]
  %s1 = inlined_call_operand.vmem [shape: bf16[512,64], index: 1, kind: input, shape index: {}]
  %s2 = inlined_call_operand.vmem [shape: f32[1,64], index: 2, kind: input, shape index: {}]
  %s3 = inlined_call_operand.vmem [shape: bf16[16,64], index: 3, kind: output, shape index: {}]
  %s4 = sld [smem:[#allocation0]]
  $region22: #{pose_conditioning_embedding_pallas.6} parent=0
    _
  %s6 = ssub.s32 1, %s4
  %s7 = scalar_select 0, %s6, %s4
  // Predicated region
  $region2: #{pose_conditioning_embedding_pallas.6} parent=0 // pred_check
    _
  $region3: #{pose_conditioning_embedding_pallas.6} parent=0 // pred_check_branch
    %9 = sbr.rel (0) target = $region5
  $region4: #{pose_conditioning_embedding_pallas.6} parent=0 // pred_region
    _
  $region5: #{pose_conditioning_embedding_pallas.6} parent=0 // pred_fallthru
    _
  // Predicated region
  $region6: #{pose_conditioning_embedding_pallas.6} parent=0 // pred_check
    _
  $region7: #{pose_conditioning_embedding_pallas.6} parent=0 // pred_check_branch
    %11 = sbr.rel (0) target = $region9
  $region8: #{pose_conditioning_embedding_pallas.6} parent=0 // pred_region
    _
  $region9: #{pose_conditioning_embedding_pallas.6} parent=0 // pred_fallthru
    _
  // Predicated region
  $region10: #{pose_conditioning_embedding_pallas.6} parent=0 // pred_check
    _
  $region11: #{pose_conditioning_embedding_pallas.6} parent=0 // pred_check_branch
    %13 = sbr.rel (0) target = $region13
  $region12: #{pose_conditioning_embedding_pallas.6} parent=0 // pred_region
    _
  $region13: #{pose_conditioning_embedding_pallas.6} parent=0 // pred_fallthru
    _
  %v14 = vld [vmem:[%s0] sm:$0xff]
  %v15 = vld [vmem:[%s0 + $0x8] sm:$0xff]
  %v16 = vld [vmem:[%s0 + $0x10] sm:$0xff]
  %v17 = vld [vmem:[%s0 + $0x18] sm:$0xff]
  %v18 = vld [vmem:[%s1] sm:$0xf]
  %v19 = vld [vmem:[%s1 + $0x4] sm:$0xf]
  %v20 = vld [vmem:[%s1 + $0x8] sm:$0xf]
  %v21 = vld [vmem:[%s1 + $0xc] sm:$0xf]
  %v22 = vld [vmem:[%s1 + $0x10] sm:$0xf]
  %v23 = vld [vmem:[%s1 + $0x14] sm:$0xf]
  %v24 = vld [vmem:[%s1 + $0x18] sm:$0xf]
  %v25 = vld [vmem:[%s1 + $0x1c] sm:$0xf]
  %v26 = vld [vmem:[%s1 + $0x20] sm:$0xf]
  %v27 = vld [vmem:[%s1 + $0x24] sm:$0xf]
  %v28 = vld [vmem:[%s1 + $0x28] sm:$0xf]
  %v29 = vld [vmem:[%s1 + $0x2c] sm:$0xf]
  %v30 = vld [vmem:[%s1 + $0x30] sm:$0xf]
  %v31 = vld [vmem:[%s1 + $0x34] sm:$0xf]
  %v32 = vld [vmem:[%s1 + $0x38] sm:$0xf]
  %v33 = vld [vmem:[%s1 + $0x3c] sm:$0xf]
  %v34 = vld [vmem:[%s1 + $0x40] sm:$0xf]
  %v35 = vld [vmem:[%s1 + $0x44] sm:$0xf]
  %v36 = vld [vmem:[%s1 + $0x48] sm:$0xf]
  %v37 = vld [vmem:[%s1 + $0x4c] sm:$0xf]
  %v38 = vld [vmem:[%s1 + $0x50] sm:$0xf]
  %v39 = vld [vmem:[%s1 + $0x54] sm:$0xf]
  %v40 = vld [vmem:[%s1 + $0x58] sm:$0xf]
  %v41 = vld [vmem:[%s1 + $0x5c] sm:$0xf]
  %v42 = vld [vmem:[%s1 + $0x60] sm:$0xf]
  %v43 = vld [vmem:[%s1 + $0x64] sm:$0xf]
  %v44 = vld [vmem:[%s1 + $0x68] sm:$0xf]
  %v45 = vld [vmem:[%s1 + $0x6c] sm:$0xf]
  %v46 = vld [vmem:[%s1 + $0x70] sm:$0xf]
  %v47 = vld [vmem:[%s1 + $0x74] sm:$0xf]
  %v48 = vld [vmem:[%s1 + $0x78] sm:$0xf]
  %v49 = vld [vmem:[%s1 + $0x7c] sm:$0xf]
  %v50 = vld [vmem:[%s1 + $0x80] sm:$0xf]
  %v51 = vld [vmem:[%s1 + $0x84] sm:$0xf]
  %v52 = vld [vmem:[%s1 + $0x88] sm:$0xf]
  %v53 = vld [vmem:[%s1 + $0x8c] sm:$0xf]
  %v54 = vld [vmem:[%s1 + $0x90] sm:$0xf]
  %v55 = vld [vmem:[%s1 + $0x94] sm:$0xf]
  %v56 = vld [vmem:[%s1 + $0x98] sm:$0xf]
  %v57 = vld [vmem:[%s1 + $0x9c] sm:$0xf]
  %v58 = vld [vmem:[%s1 + $0xa0] sm:$0xf]
  %v59 = vld [vmem:[%s1 + $0xa4] sm:$0xf]
  %v60 = vld [vmem:[%s1 + $0xa8] sm:$0xf]
  %v61 = vld [vmem:[%s1 + $0xac] sm:$0xf]
  %v62 = vld [vmem:[%s1 + $0xb0] sm:$0xf]
  %v63 = vld [vmem:[%s1 + $0xb4] sm:$0xf]
  %v64 = vld [vmem:[%s1 + $0xb8] sm:$0xf]
  %v65 = vld [vmem:[%s1 + $0xbc] sm:$0xf]
  %v66 = vld [vmem:[%s1 + $0xc0] sm:$0xf]
  %v67 = vld [vmem:[%s1 + $0xc4] sm:$0xf]
  %v68 = vld [vmem:[%s1 + $0xc8] sm:$0xf]
  %v69 = vld [vmem:[%s1 + $0xcc] sm:$0xf]
  %v70 = vld [vmem:[%s1 + $0xd0] sm:$0xf]
  %v71 = vld [vmem:[%s1 + $0xd4] sm:$0xf]
  %v72 = vld [vmem:[%s1 + $0xd8] sm:$0xf]
  %v73 = vld [vmem:[%s1 + $0xdc] sm:$0xf]
  %v74 = vld [vmem:[%s1 + $0xe0] sm:$0xf]
  %v75 = vld [vmem:[%s1 + $0xe4] sm:$0xf]
  %v76 = vld [vmem:[%s1 + $0xe8] sm:$0xf]
  %v77 = vld [vmem:[%s1 + $0xec] sm:$0xf]
  %v78 = vld [vmem:[%s1 + $0xf0] sm:$0xf]
  %v79 = vld [vmem:[%s1 + $0xf4] sm:$0xf]
  %v80 = vld [vmem:[%s1 + $0xf8] sm:$0xf]
  %v81 = vld [vmem:[%s1 + $0xfc] sm:$0xf]
  %v82 = vld [vmem:[%s2] sm:$0x1]
  %v84 = vperm.slane %v82, 0
  %v90 = vunpack.c.l.b16 %v14
  %v91 = vunpack.c.h.b16 %v14
  %v92 = vunpack.c.l.b16 %v15
  %v93 = vunpack.c.h.b16 %v15
  %v94 = vunpack.c.l.b16 %v16
  %v95 = vunpack.c.h.b16 %v16
  %v96 = vunpack.c.l.b16 %v17
  %v97 = vunpack.c.h.b16 %v17
  %v98 = vpack.c.b16 %v94, %v90
  %v99 = vpack.c.b16 %v95, %v91
  %v100 = vpack.c.b16 %v96, %v92
  %v101 = vpack.c.b16 %v97, %v93
  %v170 = vunpack.c.l.b16 %v18
  %v171 = vunpack.c.l.b16 %v19
  %v172 = vunpack.c.l.b16 %v20
  %v173 = vunpack.c.l.b16 %v21
  %v174 = vunpack.c.l.b16 %v22
  %v175 = vunpack.c.l.b16 %v23
  %v176 = vunpack.c.l.b16 %v24
  %v177 = vunpack.c.l.b16 %v25
  %v178 = vunpack.c.l.b16 %v26
  %v179 = vunpack.c.l.b16 %v27
  %v180 = vunpack.c.l.b16 %v28
  %v181 = vunpack.c.l.b16 %v29
  %v182 = vunpack.c.l.b16 %v30
  %v183 = vunpack.c.l.b16 %v31
  %v184 = vunpack.c.l.b16 %v32
  %v185 = vunpack.c.l.b16 %v33
  %v186 = vunpack.c.l.b16 %v34
  %v187 = vunpack.c.l.b16 %v35
  %v188 = vunpack.c.l.b16 %v36
  %v189 = vunpack.c.l.b16 %v37
  %v190 = vunpack.c.l.b16 %v38
  %v191 = vunpack.c.l.b16 %v39
  %v192 = vunpack.c.l.b16 %v40
  %v193 = vunpack.c.l.b16 %v41
  %v194 = vunpack.c.l.b16 %v42
  %v195 = vunpack.c.l.b16 %v43
  %v196 = vunpack.c.l.b16 %v44
  %v197 = vunpack.c.l.b16 %v45
  %v198 = vunpack.c.l.b16 %v46
  %v199 = vunpack.c.l.b16 %v47
  %v200 = vunpack.c.l.b16 %v48
  %v201 = vunpack.c.l.b16 %v49
  %v202 = vunpack.c.l.b16 %v50
  %v203 = vunpack.c.l.b16 %v51
  %v204 = vunpack.c.l.b16 %v52
  %v205 = vunpack.c.l.b16 %v53
  %v206 = vunpack.c.l.b16 %v54
  %v207 = vunpack.c.l.b16 %v55
  %v208 = vunpack.c.l.b16 %v56
  %v209 = vunpack.c.l.b16 %v57
  %v210 = vunpack.c.l.b16 %v58
  %v211 = vunpack.c.l.b16 %v59
  %v212 = vunpack.c.l.b16 %v60
  %v213 = vunpack.c.l.b16 %v61
  %v214 = vunpack.c.l.b16 %v62
  %v215 = vunpack.c.l.b16 %v63
  %v216 = vunpack.c.l.b16 %v64
  %v217 = vunpack.c.l.b16 %v65
  %v218 = vunpack.c.l.b16 %v66
  %v219 = vunpack.c.l.b16 %v67
  %v220 = vunpack.c.l.b16 %v68
  %v221 = vunpack.c.l.b16 %v69
  %v222 = vunpack.c.l.b16 %v70
  %v223 = vunpack.c.l.b16 %v71
  %v224 = vunpack.c.l.b16 %v72
  %v225 = vunpack.c.l.b16 %v73
  %v226 = vunpack.c.l.b16 %v74
  %v227 = vunpack.c.l.b16 %v75
  %v228 = vunpack.c.l.b16 %v76
  %v229 = vunpack.c.l.b16 %v77
  %v230 = vunpack.c.l.b16 %v78
  %v231 = vunpack.c.l.b16 %v79
  %v232 = vunpack.c.l.b16 %v80
  %v233 = vunpack.c.l.b16 %v81
  %v234 = vpack.c.b16 %v171, %v170
  %v235 = vpack.c.b16 %v173, %v172
  %v236 = vpack.c.b16 %v175, %v174
  %v237 = vpack.c.b16 %v177, %v176
  %v238 = vpack.c.b16 %v179, %v178
  %v239 = vpack.c.b16 %v181, %v180
  %v240 = vpack.c.b16 %v183, %v182
  %v241 = vpack.c.b16 %v185, %v184
  %v242 = vpack.c.b16 %v187, %v186
  %v243 = vpack.c.b16 %v189, %v188
  %v244 = vpack.c.b16 %v191, %v190
  %v245 = vpack.c.b16 %v193, %v192
  %v246 = vpack.c.b16 %v195, %v194
  %v247 = vpack.c.b16 %v197, %v196
  %v248 = vpack.c.b16 %v199, %v198
  %v249 = vpack.c.b16 %v201, %v200
  %v250 = vpack.c.b16 %v203, %v202
  %v251 = vpack.c.b16 %v205, %v204
  %v252 = vpack.c.b16 %v207, %v206
  %v253 = vpack.c.b16 %v209, %v208
  %v254 = vpack.c.b16 %v211, %v210
  %v255 = vpack.c.b16 %v213, %v212
  %v256 = vpack.c.b16 %v215, %v214
  %v257 = vpack.c.b16 %v217, %v216
  %v258 = vpack.c.b16 %v219, %v218
  %v259 = vpack.c.b16 %v221, %v220
  %v260 = vpack.c.b16 %v223, %v222
  %v261 = vpack.c.b16 %v225, %v224
  %v262 = vpack.c.b16 %v227, %v226
  %v263 = vpack.c.b16 %v229, %v228
  %v264 = vpack.c.b16 %v231, %v230
  %v265 = vpack.c.b16 %v233, %v232
  %298 = vmatpush.bf16.msra.mxu0 %v241
  %299 = vmatpush.bf16.msra.mxu0 %v240
  %300 = vmatpush.bf16.msra.mxu0 %v239
  %301 = vmatpush.bf16.msra.mxu0 %v238
  %302 = vmatpush.bf16.msra.mxu0 %v237
  %303 = vmatpush.bf16.msra.mxu0 %v236
  %304 = vmatpush.bf16.msra.mxu0 %v235
  %305 = vmatpush.bf16.msra.mxu0 %v234
  %306 = vmatmul.bf16.gmra.mxu0 %v98
  %v307 = vpop.f32.mrf.mxu0
  %v308 = vadd.f32 %v84, %v307
  %v309 = vpop.f32.mrf.mxu0
  %v310 = vadd.f32 %v84, %v309
  %311 = vdwg.mxu0
  %312 = vmatpush.bf16.msra.mxu0 %v249
  %313 = vmatpush.bf16.msra.mxu0 %v248
  %314 = vmatpush.bf16.msra.mxu0 %v247
  %315 = vmatpush.bf16.msra.mxu0 %v246
  %316 = vmatpush.bf16.msra.mxu0 %v245
  %317 = vmatpush.bf16.msra.mxu0 %v244
  %318 = vmatpush.bf16.msra.mxu0 %v243
  %319 = vmatpush.bf16.msra.mxu0 %v242
  %320 = vmatmul.bf16.gmra.mxu0 %v99
  %v321 = vpop.f32.mrf.mxu0
  %v322 = vadd.f32 %v308, %v321
  %v323 = vpop.f32.mrf.mxu0
  %v324 = vadd.f32 %v310, %v323
  %325 = vdwg.mxu0
  %326 = vmatpush.bf16.msra.mxu0 %v257
  %327 = vmatpush.bf16.msra.mxu0 %v256
  %328 = vmatpush.bf16.msra.mxu0 %v255
  %329 = vmatpush.bf16.msra.mxu0 %v254
  %330 = vmatpush.bf16.msra.mxu0 %v253
  %331 = vmatpush.bf16.msra.mxu0 %v252
  %332 = vmatpush.bf16.msra.mxu0 %v251
  %333 = vmatpush.bf16.msra.mxu0 %v250
  %334 = vmatmul.bf16.gmra.mxu0 %v100
  %v335 = vpop.f32.mrf.mxu0
  %v336 = vadd.f32 %v322, %v335
  %v337 = vpop.f32.mrf.mxu0
  %v338 = vadd.f32 %v324, %v337
  %339 = vdwg.mxu0
  %340 = vmatpush.bf16.msra.mxu0 %v265
  %341 = vmatpush.bf16.msra.mxu0 %v264
  %342 = vmatpush.bf16.msra.mxu0 %v263
  %343 = vmatpush.bf16.msra.mxu0 %v262
  %344 = vmatpush.bf16.msra.mxu0 %v261
  %345 = vmatpush.bf16.msra.mxu0 %v260
  %346 = vmatpush.bf16.msra.mxu0 %v259
  %347 = vmatpush.bf16.msra.mxu0 %v258
  %348 = vmatmul.bf16.gmra.mxu0 %v101
  %v349 = vpop.f32.mrf.mxu0
  %v350 = vadd.f32 %v336, %v349
  %v351 = vpop.f32.mrf.mxu0
  %v352 = vadd.f32 %v338, %v351
  %353 = vdwg.mxu0
  %v354 = vxor.u32 %v350, 2147483648
  %v355 = vxor.u32 %v352, 2147483648
  %v356 = vmul.f32 %v354, 1.442695
  %v357 = vpow.pop %v356
  %v358 = vmul.f32 %v355, 1.442695
  %v359 = vpow.pop %v358
  %v360 = vadd.f32 %v357, 1.0
  %v361 = vadd.f32 %v359, 1.0
  %v362 = vrcp.pop %v360
  %v363 = vmul.f32 %v360, %v362
  %v364 = vsub.f32 1.0, %v363
  %v365 = vmul.f32 %v362, %v364
  %v366 = vadd.f32 %v362, %v365
  %vm367 = vweird.f32 %v360
  %vm368 = vweird.f32 %v362
  %vm369 = vmor %vm367, %vm368
  %v370 = vsel %vm369, %v362, %v366
  %v371 = vand.u32 2147483647, %v360
  %vm372 = vcmp.eq.f32.partialorder %v371, 8.507059e+37
  %v373 = vand.u32 %v360, 2147483648
  %v374 = vor.u32 1.1754944e-38, %v373
  %v375 = vsel %vm372, %v374, %v370
  %v376 = vmul.f32 1.0, %v375
  %v377 = vrcp.pop %v361
  %v378 = vmul.f32 %v361, %v377
  %v379 = vsub.f32 1.0, %v378
  %v380 = vmul.f32 %v377, %v379
  %v381 = vadd.f32 %v377, %v380
  %vm382 = vweird.f32 %v361
  %vm383 = vweird.f32 %v377
  %vm384 = vmor %vm382, %vm383
  %v385 = vsel %vm384, %v377, %v381
  %v386 = vand.u32 2147483647, %v361
  %vm387 = vcmp.eq.f32.partialorder %v386, 8.507059e+37
  %v388 = vand.u32 %v361, 2147483648
  %v389 = vor.u32 1.1754944e-38, %v388
  %v390 = vsel %vm387, %v389, %v385
  %v391 = vmul.f32 1.0, %v390
  %v392 = vmul.f32 %v350, %v376
  %v393 = vmul.f32 %v352, %v391
  %v394 = vpack.c.bf16 %v392, %v392
  %v395 = vpack.c.bf16 %v393, %v393
  %vm396 = vcmask 519168
  %397 = vst.msk [vmem:[%s3] sm:$0xf] %vm396, %v394
  %398 = vst.msk [vmem:[%s3 + $0x4] sm:$0xf] %vm396, %v395
  // Predicated region
  $region14: #{pose_conditioning_embedding_pallas.6} parent=0 // pred_check
    _
  $region15: #{pose_conditioning_embedding_pallas.6} parent=0 // pred_check_branch
    %400 = sbr.rel (0) target = $region17
  $region16: #{pose_conditioning_embedding_pallas.6} parent=0 // pred_region
    _
  $region17: #{pose_conditioning_embedding_pallas.6} parent=0 // pred_fallthru
    _
  // Predicated region
  $region18: #{pose_conditioning_embedding_pallas.6} parent=0 // pred_check
    _
  $region19: #{pose_conditioning_embedding_pallas.6} parent=0 // pred_check_branch
    %402 = sbr.rel (0) target = $region21
  $region20: #{pose_conditioning_embedding_pallas.6} parent=0 // pred_region
    _
  $region21: #{pose_conditioning_embedding_pallas.6} parent=0 // pred_fallthru
    _

// kernel: pose_conditioning_embedding_pallas.7
$region0: #{pose_conditioning_embedding_pallas.7}
  #allocation0 [shape = 'u32[]', space=smem, size = 0x4, offset = 0x4, fixed_abs, tag = 'smem constant byte address 0x4 - core index']
  #allocation1 [shape = 'u32[72,128]{1,0:T(1,128)}', space=vmem, size = 0x9000, scoped, tag = 'internal scratch']
  #allocation2 [shape = 'f32[1]{0:T(128)S(6)}', space=smem, size = 0x200, scoped, tag = 'scoped memory for pose_conditioning_embedding_pallas.7']
  %s0 = inlined_call_operand.vmem [shape: bf16[16,576], index: 0, kind: input, shape index: {}]
  %s1 = inlined_call_operand.vmem [shape: bf16[576,128], index: 1, kind: input, shape index: {}]
  %s2 = inlined_call_operand.vmem [shape: f32[1,128], index: 2, kind: input, shape index: {}]
  %s3 = inlined_call_operand.vmem [shape: bf16[128,8], index: 3, kind: input, shape index: {}]
  %s4 = inlined_call_operand.vmem [shape: f32[1,8], index: 4, kind: input, shape index: {}]
  %s5 = inlined_call_operand.<no memory space> [shape: f32[1], index: 5, kind: input, shape index: {}]
  %s6 = inlined_call_operand.hbm [shape: f32[16,8], index: 6, kind: output, shape index: {}]
  %s7 = sld [smem:[#allocation0]]
  $region34: #{pose_conditioning_embedding_pallas.7} parent=0
    _
  %s9 = ssub.s32 1, %s7
  %s10 = scalar_select 0, %s9, %s7
  %11 = sst [smem:[#allocation2]] %s5
  $region1: #{pose_conditioning_embedding_pallas.7} parent=0
    #allocation3 [shape = 'u8[8192]{0}', space=vmem, size = 0x2000, scoped, tag = 'output window, operand 0, single buffered']
    #allocation4 [shape = 's32[1]{0}', space=sflag, size = 0x4, scoped, tag = 'scoped memory for pose_conditioning_embedding_pallas.7']
    %12 = vsyncpa [#allocation4], 0
    // Predicated region
    $region2: #{pose_conditioning_embedding_pallas.7} parent=1 // pred_check
      _
    $region3: #{pose_conditioning_embedding_pallas.7} parent=1 // pred_check_branch
      %14 = sbr.rel (0) target = $region5
    $region4: #{pose_conditioning_embedding_pallas.7} parent=1 // pred_region
      _
    $region5: #{pose_conditioning_embedding_pallas.7} parent=1 // pred_fallthru
      _
    // Predicated region
    $region6: #{pose_conditioning_embedding_pallas.7} parent=1 // pred_check
      _
    $region7: #{pose_conditioning_embedding_pallas.7} parent=1 // pred_check_branch
      %16 = sbr.rel (0) target = $region9
    $region8: #{pose_conditioning_embedding_pallas.7} parent=1 // pred_region
      _
    $region9: #{pose_conditioning_embedding_pallas.7} parent=1 // pred_fallthru
      _
    // Predicated region
    $region10: #{pose_conditioning_embedding_pallas.7} parent=1 // pred_check
      _
    $region11: #{pose_conditioning_embedding_pallas.7} parent=1 // pred_check_branch
      %18 = sbr.rel (0) target = $region13
    $region12: #{pose_conditioning_embedding_pallas.7} parent=1 // pred_region
      _
    $region13: #{pose_conditioning_embedding_pallas.7} parent=1 // pred_fallthru
      _
    // Predicated region
    $region14: #{pose_conditioning_embedding_pallas.7} parent=1 // pred_check
      _
    $region15: #{pose_conditioning_embedding_pallas.7} parent=1 // pred_check_branch
      %20 = sbr.rel (0) target = $region17
    $region16: #{pose_conditioning_embedding_pallas.7} parent=1 // pred_region
      _
    $region17: #{pose_conditioning_embedding_pallas.7} parent=1 // pred_fallthru
      _
    // Predicated region
    $region18: #{pose_conditioning_embedding_pallas.7} parent=1 // pred_check
      _
    $region19: #{pose_conditioning_embedding_pallas.7} parent=1 // pred_check_branch
      %22 = sbr.rel (0) target = $region21
    $region20: #{pose_conditioning_embedding_pallas.7} parent=1 // pred_region
      _
    $region21: #{pose_conditioning_embedding_pallas.7} parent=1 // pred_fallthru
      _
    // Predicated region
    $region22: #{pose_conditioning_embedding_pallas.7} parent=1 // pred_check
      _
    $region23: #{pose_conditioning_embedding_pallas.7} parent=1 // pred_check_branch
      %24 = sbr.rel (0) target = $region25
    $region24: #{pose_conditioning_embedding_pallas.7} parent=1 // pred_region
      _
    $region25: #{pose_conditioning_embedding_pallas.7} parent=1 // pred_fallthru
      _
    %v26 = vld [vmem:[%s0] sm:$0xff]
    %v27 = vld [vmem:[%s0 + $0x8] sm:$0xff]
    %v28 = vld [vmem:[%s0 + $0x10] sm:$0xf]
    %v29 = vld [vmem:[%s0 + $0x14] sm:$0xff]
    %v30 = vld [vmem:[%s0 + $0x1c] sm:$0xff]
    %v31 = vld [vmem:[%s0 + $0x24] sm:$0xf]
    %v32 = vld [vmem:[%s1] sm:$0xf]
    %v33 = vld [vmem:[%s1 + $0x4] sm:$0xf]
    %v34 = vld [vmem:[%s1 + $0x8] sm:$0xf]
    %v35 = vld [vmem:[%s1 + $0xc] sm:$0xf]
    %v36 = vld [vmem:[%s1 + $0x10] sm:$0xf]
    %v37 = vld [vmem:[%s1 + $0x14] sm:$0xf]
    %v38 = vld [vmem:[%s1 + $0x18] sm:$0xf]
    %v39 = vld [vmem:[%s1 + $0x1c] sm:$0xf]
    %v40 = vld [vmem:[%s1 + $0x20] sm:$0xf]
    %v41 = vld [vmem:[%s1 + $0x24] sm:$0xf]
    %v42 = vld [vmem:[%s1 + $0x28] sm:$0xf]
    %v43 = vld [vmem:[%s1 + $0x2c] sm:$0xf]
    %v44 = vld [vmem:[%s1 + $0x30] sm:$0xf]
    %v45 = vld [vmem:[%s1 + $0x34] sm:$0xf]
    %v46 = vld [vmem:[%s1 + $0x38] sm:$0xf]
    %v47 = vld [vmem:[%s1 + $0x3c] sm:$0xf]
    %v48 = vld [vmem:[%s1 + $0x40] sm:$0xf]
    %v49 = vld [vmem:[%s1 + $0x44] sm:$0xf]
    %v50 = vld [vmem:[%s1 + $0x48] sm:$0xf]
    %v51 = vld [vmem:[%s1 + $0x4c] sm:$0xf]
    %v52 = vld [vmem:[%s1 + $0x50] sm:$0xf]
    %v53 = vld [vmem:[%s1 + $0x54] sm:$0xf]
    %v54 = vld [vmem:[%s1 + $0x58] sm:$0xf]
    %v55 = vld [vmem:[%s1 + $0x5c] sm:$0xf]
    %v56 = vld [vmem:[%s1 + $0x60] sm:$0xf]
    %v57 = vld [vmem:[%s1 + $0x64] sm:$0xf]
    %v58 = vld [vmem:[%s1 + $0x68] sm:$0xf]
    %v59 = vld [vmem:[%s1 + $0x6c] sm:$0xf]
    %v60 = vld [vmem:[%s1 + $0x70] sm:$0xf]
    %v61 = vld [vmem:[%s1 + $0x74] sm:$0xf]
    %v62 = vld [vmem:[%s1 + $0x78] sm:$0xf]
    %v63 = vld [vmem:[%s1 + $0x7c] sm:$0xf]
    %v64 = vld [vmem:[%s1 + $0x80] sm:$0xf]
    %v65 = vld [vmem:[%s1 + $0x84] sm:$0xf]
    %v66 = vld [vmem:[%s1 + $0x88] sm:$0xf]
    %v67 = vld [vmem:[%s1 + $0x8c] sm:$0xf]
    %v68 = vld [vmem:[%s1 + $0x90] sm:$0xf]
    %v69 = vld [vmem:[%s1 + $0x94] sm:$0xf]
    %v70 = vld [vmem:[%s1 + $0x98] sm:$0xf]
    %v71 = vld [vmem:[%s1 + $0x9c] sm:$0xf]
    %v72 = vld [vmem:[%s1 + $0xa0] sm:$0xf]
    %v73 = vld [vmem:[%s1 + $0xa4] sm:$0xf]
    %v74 = vld [vmem:[%s1 + $0xa8] sm:$0xf]
    %v75 = vld [vmem:[%s1 + $0xac] sm:$0xf]
    %v76 = vld [vmem:[%s1 + $0xb0] sm:$0xf]
    %v77 = vld [vmem:[%s1 + $0xb4] sm:$0xf]
    %v78 = vld [vmem:[%s1 + $0xb8] sm:$0xf]
    %v79 = vld [vmem:[%s1 + $0xbc] sm:$0xf]
    %v80 = vld [vmem:[%s1 + $0xc0] sm:$0xf]
    %v81 = vld [vmem:[%s1 + $0xc4] sm:$0xf]
    %v82 = vld [vmem:[%s1 + $0xc8] sm:$0xf]
    %v83 = vld [vmem:[%s1 + $0xcc] sm:$0xf]
    %v84 = vld [vmem:[%s1 + $0xd0] sm:$0xf]
    %v85 = vld [vmem:[%s1 + $0xd4] sm:$0xf]
    %v86 = vld [vmem:[%s1 + $0xd8] sm:$0xf]
    %v87 = vld [vmem:[%s1 + $0xdc] sm:$0xf]
    %v88 = vld [vmem:[%s1 + $0xe0] sm:$0xf]
    %v89 = vld [vmem:[%s1 + $0xe4] sm:$0xf]
    %v90 = vld [vmem:[%s1 + $0xe8] sm:$0xf]
    %v91 = vld [vmem:[%s1 + $0xec] sm:$0xf]
    %v92 = vld [vmem:[%s1 + $0xf0] sm:$0xf]
    %v93 = vld [vmem:[%s1 + $0xf4] sm:$0xf]
    %v94 = vld [vmem:[%s1 + $0xf8] sm:$0xf]
    %v95 = vld [vmem:[%s1 + $0xfc] sm:$0xf]
    %v96 = vld [vmem:[%s1 + $0x100] sm:$0xf]
    %v97 = vld [vmem:[%s1 + $0x104] sm:$0xf]
    %v98 = vld [vmem:[%s1 + $0x108] sm:$0xf]
    %v99 = vld [vmem:[%s1 + $0x10c] sm:$0xf]
    %v100 = vld [vmem:[%s1 + $0x110] sm:$0xf]
    %v101 = vld [vmem:[%s1 + $0x114] sm:$0xf]
    %v102 = vld [vmem:[%s1 + $0x118] sm:$0xf]
    %v103 = vld [vmem:[%s1 + $0x11c] sm:$0xf]
    %v104 = vld [vmem:[%s2] sm:$0x1]
    %v106 = vperm.slane %v104, 0
    %v114 = vunpack.c.l.b16 %v26
    %v115 = vunpack.c.h.b16 %v26
    %v116 = vunpack.c.l.b16 %v27
    %v117 = vunpack.c.h.b16 %v27
    %v118 = vunpack.c.l.b16 %v28
    %v119 = vunpack.c.l.b16 %v29
    %v120 = vunpack.c.h.b16 %v29
    %v121 = vunpack.c.l.b16 %v30
    %v122 = vunpack.c.h.b16 %v30
    %v123 = vunpack.c.l.b16 %v31
    %v124 = vpack.c.b16 %v119, %v114
    %v125 = vpack.c.b16 %v120, %v115
    %v126 = vpack.c.b16 %v121, %v116
    %v127 = vpack.c.b16 %v122, %v117
    %v128 = vpack.c.b16 %v123, %v118
    %v205 = vunpack.c.l.b16 %v32
    %v206 = vunpack.c.l.b16 %v33
    %v207 = vunpack.c.l.b16 %v34
    %v208 = vunpack.c.l.b16 %v35
    %v209 = vunpack.c.l.b16 %v36
    %v210 = vunpack.c.l.b16 %v37
    %v211 = vunpack.c.l.b16 %v38
    %v212 = vunpack.c.l.b16 %v39
    %v213 = vunpack.c.l.b16 %v40
    %v214 = vunpack.c.l.b16 %v41
    %v215 = vunpack.c.l.b16 %v42
    %v216 = vunpack.c.l.b16 %v43
    %v217 = vunpack.c.l.b16 %v44
    %v218 = vunpack.c.l.b16 %v45
    %v219 = vunpack.c.l.b16 %v46
    %v220 = vunpack.c.l.b16 %v47
    %v221 = vunpack.c.l.b16 %v48
    %v222 = vunpack.c.l.b16 %v49
    %v223 = vunpack.c.l.b16 %v50
    %v224 = vunpack.c.l.b16 %v51
    %v225 = vunpack.c.l.b16 %v52
    %v226 = vunpack.c.l.b16 %v53
    %v227 = vunpack.c.l.b16 %v54
    %v228 = vunpack.c.l.b16 %v55
    %v229 = vunpack.c.l.b16 %v56
    %v230 = vunpack.c.l.b16 %v57
    %v231 = vunpack.c.l.b16 %v58
    %v232 = vunpack.c.l.b16 %v59
    %v233 = vunpack.c.l.b16 %v60
    %v234 = vunpack.c.l.b16 %v61
    %v235 = vunpack.c.l.b16 %v62
    %v236 = vunpack.c.l.b16 %v63
    %v237 = vunpack.c.l.b16 %v64
    %v238 = vunpack.c.l.b16 %v65
    %v239 = vunpack.c.l.b16 %v66
    %v240 = vunpack.c.l.b16 %v67
    %v241 = vunpack.c.l.b16 %v68
    %v242 = vunpack.c.l.b16 %v69
    %v243 = vunpack.c.l.b16 %v70
    %v244 = vunpack.c.l.b16 %v71
    %v245 = vunpack.c.l.b16 %v72
    %v246 = vunpack.c.l.b16 %v73
    %v247 = vunpack.c.l.b16 %v74
    %v248 = vunpack.c.l.b16 %v75
    %v249 = vunpack.c.l.b16 %v76
    %v250 = vunpack.c.l.b16 %v77
    %v251 = vunpack.c.l.b16 %v78
    %v252 = vunpack.c.l.b16 %v79
    %v253 = vunpack.c.l.b16 %v80
    %v254 = vunpack.c.l.b16 %v81
    %v255 = vunpack.c.l.b16 %v82
    %v256 = vunpack.c.l.b16 %v83
    %v257 = vunpack.c.l.b16 %v84
    %v258 = vunpack.c.l.b16 %v85
    %v259 = vunpack.c.l.b16 %v86
    %v260 = vunpack.c.l.b16 %v87
    %v261 = vunpack.c.l.b16 %v88
    %v262 = vunpack.c.l.b16 %v89
    %v263 = vunpack.c.l.b16 %v90
    %v264 = vunpack.c.l.b16 %v91
    %v265 = vunpack.c.l.b16 %v92
    %v266 = vunpack.c.l.b16 %v93
    %v267 = vunpack.c.l.b16 %v94
    %v268 = vunpack.c.l.b16 %v95
    %v269 = vunpack.c.l.b16 %v96
    %v270 = vunpack.c.l.b16 %v97
    %v271 = vunpack.c.l.b16 %v98
    %v272 = vunpack.c.l.b16 %v99
    %v273 = vunpack.c.l.b16 %v100
    %v274 = vunpack.c.l.b16 %v101
    %v275 = vunpack.c.l.b16 %v102
    %v276 = vunpack.c.l.b16 %v103
    %v277 = vpack.c.b16 %v206, %v205
    %v278 = vpack.c.b16 %v208, %v207
    %v279 = vpack.c.b16 %v210, %v209
    %v280 = vpack.c.b16 %v212, %v211
    %v281 = vpack.c.b16 %v214, %v213
    %v282 = vpack.c.b16 %v216, %v215
    %v283 = vpack.c.b16 %v218, %v217
    %v284 = vpack.c.b16 %v220, %v219
    %v285 = vpack.c.b16 %v222, %v221
    %v286 = vpack.c.b16 %v224, %v223
    %v287 = vpack.c.b16 %v226, %v225
    %v288 = vpack.c.b16 %v228, %v227
    %v289 = vpack.c.b16 %v230, %v229
    %v290 = vpack.c.b16 %v232, %v231
    %v291 = vpack.c.b16 %v234, %v233
    %v292 = vpack.c.b16 %v236, %v235
    %v293 = vpack.c.b16 %v238, %v237
    %v294 = vpack.c.b16 %v240, %v239
    %v295 = vpack.c.b16 %v242, %v241
    %v296 = vpack.c.b16 %v244, %v243
    %v297 = vpack.c.b16 %v246, %v245
    %v298 = vpack.c.b16 %v248, %v247
    %v299 = vpack.c.b16 %v250, %v249
    %v300 = vpack.c.b16 %v252, %v251
    %v301 = vpack.c.b16 %v254, %v253
    %v302 = vpack.c.b16 %v256, %v255
    %v303 = vpack.c.b16 %v258, %v257
    %v304 = vpack.c.b16 %v260, %v259
    %v305 = vpack.c.b16 %v262, %v261
    %v306 = vpack.c.b16 %v264, %v263
    %v307 = vpack.c.b16 %v266, %v265
    %v308 = vpack.c.b16 %v268, %v267
    %v309 = vpack.c.b16 %v270, %v269
    %v310 = vpack.c.b16 %v272, %v271
    %v311 = vpack.c.b16 %v274, %v273
    %v312 = vpack.c.b16 %v276, %v275
    %vm349 = vcmask 523264
    %v351 = vsel %vm349, %v128, 0
    %353 = vmatpush.bf16.msra.mxu0 %v284
    %354 = vmatpush.bf16.msra.mxu0 %v283
    %355 = vmatpush.bf16.msra.mxu0 %v282
    %356 = vmatpush.bf16.msra.mxu0 %v281
    %357 = vmatpush.bf16.msra.mxu0 %v280
    %358 = vmatpush.bf16.msra.mxu0 %v279
    %359 = vmatpush.bf16.msra.mxu0 %v278
    %360 = vmatpush.bf16.msra.mxu0 %v277
    %361 = vmatmul.bf16.gmra.mxu0 %v124
    %v362 = vpop.f32.mrf.mxu0
    %v363 = vadd.f32 %v106, %v362
    %v364 = vpop.f32.mrf.mxu0
    %v365 = vadd.f32 %v106, %v364
    %366 = vdwg.mxu0
    %367 = vmatpush.bf16.msra.mxu0 %v292
    %368 = vmatpush.bf16.msra.mxu0 %v291
    %369 = vmatpush.bf16.msra.mxu0 %v290
    %370 = vmatpush.bf16.msra.mxu0 %v289
    %371 = vmatpush.bf16.msra.mxu0 %v288
    %372 = vmatpush.bf16.msra.mxu0 %v287
    %373 = vmatpush.bf16.msra.mxu0 %v286
    %374 = vmatpush.bf16.msra.mxu0 %v285
    %375 = vmatmul.bf16.gmra.mxu0 %v125
    %v376 = vpop.f32.mrf.mxu0
    %v377 = vadd.f32 %v363, %v376
    %v378 = vpop.f32.mrf.mxu0
    %v379 = vadd.f32 %v365, %v378
    %380 = vdwg.mxu0
    %381 = vmatpush.bf16.msra.mxu0 %v300
    %382 = vmatpush.bf16.msra.mxu0 %v299
    %383 = vmatpush.bf16.msra.mxu0 %v298
    %384 = vmatpush.bf16.msra.mxu0 %v297
    %385 = vmatpush.bf16.msra.mxu0 %v296
    %386 = vmatpush.bf16.msra.mxu0 %v295
    %387 = vmatpush.bf16.msra.mxu0 %v294
    %388 = vmatpush.bf16.msra.mxu0 %v293
    %389 = vmatmul.bf16.gmra.mxu0 %v126
    %v390 = vpop.f32.mrf.mxu0
    %v391 = vadd.f32 %v377, %v390
    %v392 = vpop.f32.mrf.mxu0
    %v393 = vadd.f32 %v379, %v392
    %394 = vdwg.mxu0
    %395 = vmatpush.bf16.msra.mxu0 %v308
    %396 = vmatpush.bf16.msra.mxu0 %v307
    %397 = vmatpush.bf16.msra.mxu0 %v306
    %398 = vmatpush.bf16.msra.mxu0 %v305
    %399 = vmatpush.bf16.msra.mxu0 %v304
    %400 = vmatpush.bf16.msra.mxu0 %v303
    %401 = vmatpush.bf16.msra.mxu0 %v302
    %402 = vmatpush.bf16.msra.mxu0 %v301
    %403 = vmatmul.bf16.gmra.mxu0 %v127
    %v404 = vpop.f32.mrf.mxu0
    %v405 = vadd.f32 %v391, %v404
    %v406 = vpop.f32.mrf.mxu0
    %v407 = vadd.f32 %v393, %v406
    %408 = vdwg.mxu0
    %409 = vmatpush.bf16.msra.mxu0 0
    %410 = vmatpush.bf16.msra.mxu0 0
    %411 = vmatpush.bf16.msra.mxu0 0
    %412 = vmatpush.bf16.msra.mxu0 0
    %413 = vmatpush.bf16.msra.mxu0 %v312
    %414 = vmatpush.bf16.msra.mxu0 %v311
    %415 = vmatpush.bf16.msra.mxu0 %v310
    %416 = vmatpush.bf16.msra.mxu0 %v309
    %417 = vmatmul.bf16.gmra.mxu0 %v351
    %v418 = vpop.f32.mrf.mxu0
    %v419 = vadd.f32 %v405, %v418
    %v420 = vpop.f32.mrf.mxu0
    %v421 = vadd.f32 %v407, %v420
    %422 = vdwg.mxu0
    %v423 = vxor.u32 %v419, 2147483648
    %v424 = vxor.u32 %v421, 2147483648
    %v425 = vmul.f32 %v423, 1.442695
    %v426 = vpow.pop %v425
    %v427 = vmul.f32 %v424, 1.442695
    %v428 = vpow.pop %v427
    %v429 = vadd.f32 %v426, 1.0
    %v430 = vadd.f32 %v428, 1.0
    %v431 = vrcp.pop %v429
    %v432 = vmul.f32 %v429, %v431
    %v433 = vsub.f32 1.0, %v432
    %v434 = vmul.f32 %v431, %v433
    %v435 = vadd.f32 %v431, %v434
    %vm436 = vweird.f32 %v429
    %vm437 = vweird.f32 %v431
    %vm438 = vmor %vm436, %vm437
    %v439 = vsel %vm438, %v431, %v435
    %v440 = vand.u32 2147483647, %v429
    %vm441 = vcmp.eq.f32.partialorder %v440, 8.507059e+37
    %v442 = vand.u32 %v429, 2147483648
    %v443 = vor.u32 1.1754944e-38, %v442
    %v444 = vsel %vm441, %v443, %v439
    %v445 = vmul.f32 1.0, %v444
    %v446 = vrcp.pop %v430
    %v447 = vmul.f32 %v430, %v446
    %v448 = vsub.f32 1.0, %v447
    %v449 = vmul.f32 %v446, %v448
    %v450 = vadd.f32 %v446, %v449
    %vm451 = vweird.f32 %v430
    %vm452 = vweird.f32 %v446
    %vm453 = vmor %vm451, %vm452
    %v454 = vsel %vm453, %v446, %v450
    %v455 = vand.u32 2147483647, %v430
    %vm456 = vcmp.eq.f32.partialorder %v455, 8.507059e+37
    %v457 = vand.u32 %v430, 2147483648
    %v458 = vor.u32 1.1754944e-38, %v457
    %v459 = vsel %vm456, %v458, %v454
    %v460 = vmul.f32 1.0, %v459
    %v461 = vmul.f32 %v419, %v445
    %v462 = vmul.f32 %v421, %v460
    %v463 = vpack.c.bf16 %v462, %v461
    %v464 = vld [vmem:[%s3] sm:$0xf]
    %v465 = vld [vmem:[%s3 + $0x4] sm:$0xf]
    %v466 = vld [vmem:[%s3 + $0x8] sm:$0xf]
    %v467 = vld [vmem:[%s3 + $0xc] sm:$0xf]
    %v468 = vld [vmem:[%s3 + $0x10] sm:$0xf]
    %v469 = vld [vmem:[%s3 + $0x14] sm:$0xf]
    %v470 = vld [vmem:[%s3 + $0x18] sm:$0xf]
    %v471 = vld [vmem:[%s3 + $0x1c] sm:$0xf]
    %v472 = vld [vmem:[%s3 + $0x20] sm:$0xf]
    %v473 = vld [vmem:[%s3 + $0x24] sm:$0xf]
    %v474 = vld [vmem:[%s3 + $0x28] sm:$0xf]
    %v475 = vld [vmem:[%s3 + $0x2c] sm:$0xf]
    %v476 = vld [vmem:[%s3 + $0x30] sm:$0xf]
    %v477 = vld [vmem:[%s3 + $0x34] sm:$0xf]
    %v478 = vld [vmem:[%s3 + $0x38] sm:$0xf]
    %v479 = vld [vmem:[%s3 + $0x3c] sm:$0xf]
    %v480 = vld [vmem:[%s4] sm:$0x1]
    %v482 = vperm.slane %v480, 0
    %v500 = vunpack.c.l.b16 %v464
    %v501 = vunpack.c.l.b16 %v465
    %v502 = vunpack.c.l.b16 %v466
    %v503 = vunpack.c.l.b16 %v467
    %v504 = vunpack.c.l.b16 %v468
    %v505 = vunpack.c.l.b16 %v469
    %v506 = vunpack.c.l.b16 %v470
    %v507 = vunpack.c.l.b16 %v471
    %v508 = vunpack.c.l.b16 %v472
    %v509 = vunpack.c.l.b16 %v473
    %v510 = vunpack.c.l.b16 %v474
    %v511 = vunpack.c.l.b16 %v475
    %v512 = vunpack.c.l.b16 %v476
    %v513 = vunpack.c.l.b16 %v477
    %v514 = vunpack.c.l.b16 %v478
    %v515 = vunpack.c.l.b16 %v479
    %v516 = vpack.c.b16 %v501, %v500
    %v517 = vpack.c.b16 %v503, %v502
    %v518 = vpack.c.b16 %v505, %v504
    %v519 = vpack.c.b16 %v507, %v506
    %v520 = vpack.c.b16 %v509, %v508
    %v521 = vpack.c.b16 %v511, %v510
    %v522 = vpack.c.b16 %v513, %v512
    %v523 = vpack.c.b16 %v515, %v514
    %532 = vmatpush.bf16.msra.mxu0 %v523
    %533 = vmatpush.bf16.msra.mxu0 %v522
    %534 = vmatpush.bf16.msra.mxu0 %v521
    %535 = vmatpush.bf16.msra.mxu0 %v520
    %536 = vmatpush.bf16.msra.mxu0 %v519
    %537 = vmatpush.bf16.msra.mxu0 %v518
    %538 = vmatpush.bf16.msra.mxu0 %v517
    %539 = vmatpush.bf16.msra.mxu0 %v516
    %540 = vmatmul.bf16.gmra.mxu0 %v463
    %v541 = vpop.f32.mrf.mxu0
    %v542 = vadd.f32 %v482, %v541
    %v543 = vpop.f32.mrf.mxu0
    %v544 = vadd.f32 %v482, %v543
    %545 = vdwg.mxu0
    %s546 = sld [smem:[#allocation2]]
    %v547 = vstv %s546
    %v548 = vmul.f32 %v542, %v547
    %v549 = vmul.f32 %v544, %v547
    %vm550 = vcmask 64512
    %551 = vst.msk [vmem:[#allocation3] sm:$0xff] %vm550, %v548
    %552 = vst.msk [vmem:[#allocation3 + $0x8] sm:$0xff] %vm550, %v549
    // Predicated region
    $region26: #{pose_conditioning_embedding_pallas.7} parent=1 // pred_check
      _
    $region27: #{pose_conditioning_embedding_pallas.7} parent=1 // pred_check_branch
      %554 = sbr.rel (0) target = $region29
    $region28: #{pose_conditioning_embedding_pallas.7} parent=1 // pred_region
      %556 = vsyncadd [#allocation4], 0
      %s557 = sshll.u32 [#allocation3], 4
      %s558 = int_to_ptr.vmem [resolvable:$true] %s557
      %s559 = sshll.u32 %s6, 4
      %s560 = int_to_ptr.hbm [resolvable:$true] %s559
      %565 = dma.vmem_to_hbm [thread:$0]  %s558, 256, %s560, [#allocation4], 128, 128, 8
    $region29: #{pose_conditioning_embedding_pallas.7} parent=1 // pred_fallthru
      _
    // Predicated region
    $region30: #{pose_conditioning_embedding_pallas.7} parent=1 // pred_check
      _
    $region31: #{pose_conditioning_embedding_pallas.7} parent=1 // pred_check_branch
      %567 = sbr.rel (0) target = $region33
    $region32: #{pose_conditioning_embedding_pallas.7} parent=1 // pred_region
      %569 = dma.done [#allocation4], 256
    $region33: #{pose_conditioning_embedding_pallas.7} parent=1 // pred_fallthru
      _
    %570 = vsyncpa [#allocation4], 1

</llo_original>
